<compile_context>
chip_gen: v6e
topology: v6e:2x2x1
jax: 0.10.0
libtpu: 0.0.40
codegen_flags: <defaults>
</compile_context>

<pallas_src>
import jax
import jax.numpy as jnp
from jax import lax
from jax.experimental import pallas as pl
from jax.experimental.pallas import tpu as pltpu


def _make_net_kernel(block_cfgs, K, W):
    """Fused forward for the whole TCN.

    block_cfgs: tuple of (dilation, has_downsample) per TemporalBlock2D.
    Kernel ref order: x, row_ids, col_ids, [w1, b1, w2, b2, (wd, bd)] per block, out.
    Activations are (C_pad, H*W) f32 values kept on-chip the whole time.
    """

    def kernel(*refs):
        x_ref, row_ref, col_ref = refs[0], refs[1], refs[2]
        o_ref = refs[-1]
        prefs = refs[3:-1]

        row_ids = row_ref[...]          # (1, HW) int32: flat index // W
        col_ids = col_ref[...]          # (1, HW) int32: flat index %  W
        act = x_ref[...]                # (Cin_pad, HW) f32

        def conv_causal(a, wr, b, d):
            # Causal dilated KxK conv == single matmul against an im2col slab.
            # a: (c, HW), wr: (cout, K*K*c), b: (cout, 1)
            taps = []
            for kh in range(K):
                sh = (K - 1 - kh) * d          # rows the tap is shifted down
                for kw in range(K):
                    sw = (K - 1 - kw) * d      # cols the tap is shifted right
                    if sh == 0 and sw == 0:
                        taps.append(a)
                    else:
                        # roll along the flattened HW lane axis, then zero the
                        # rows/cols that would have read out of the (causal) pad.
                        t = pltpu.roll(a, shift=sh * W + sw, axis=1)
                        m = jnp.logical_and(row_ids >= sh,
                                            col_ids >= sw).astype(a.dtype)
                        taps.append(t * m)     # (c, HW) * (1, HW) broadcast
            slab = jnp.concatenate(taps, axis=0)           # (K*K*c, HW) im2col
            out = jnp.dot(wr, slab, preferred_element_type=jnp.float32)
            return out + b                                  # bias broadcast over lanes

        idx = 0
        for (d, has_ds) in block_cfgs:
            w1 = prefs[idx][...]
            b1 = prefs[idx + 1][...]
            w2 = prefs[idx + 2][...]
            b2 = prefs[idx + 3][...]
            idx += 4
            if has_ds:
                wd = prefs[idx][...]
                bd = prefs[idx + 1][...]
                idx += 2
                res = jnp.dot(wd, act, preferred_element_type=jnp.float32) + bd
            else:
                res = act
            # conv1 + chomp + relu (dropout1: identity at inference)
            o1 = jnp.maximum(conv_causal(act, w1, b1, d), 0.0)
            # conv2 + chomp + relu (dropout2: identity at inference)
            o2 = jnp.maximum(conv_causal(o1, w2, b2, d), 0.0)
            # residual add + final relu
            act = jnp.maximum(o2 + res, 0.0)

        o_ref[...] = act.astype(o_ref.dtype)

    return kernel


def temporal_conv_net_2d(x_nchw, params_list, kernel_size):
    """Full TemporalConvNet2D forward in a single pallas_call.

    x_nchw:      (N, C, H, W) float32 (torch layout)
    params_list: per block (w1, b1, w2, b2, wd, bd), weights in OIHW, wd may be None
    returns:     (N, C_out_last, H, W) float32
    """
    N, C, H, W = x_nchw.shape
    HW = H * W
    K = kernel_size
    rup8 = lambda c: ((c + 7) // 8) * 8

    # Channel-first, lane-dense activation layout: (N, C_pad, H*W).
    cin_p = rup8(C)
    x2 = x_nchw.reshape(N, C, HW)
    if cin_p != C:
        x2 = jnp.pad(x2, ((0, 0), (0, cin_p - C), (0, 0)))   # tiny layout prep only

    # Precomputed row/col indices of the flattened spatial axis (for causal masks).
    row_ids = (jnp.arange(HW, dtype=jnp.int32) // W).reshape(1, HW)
    col_ids = (jnp.arange(HW, dtype=jnp.int32) % W).reshape(1, HW)

    args = [x2, row_ids, col_ids]
    in_specs = [
        pl.BlockSpec((None, cin_p, HW), lambda n: (n, 0, 0)),
        pl.BlockSpec((1, HW), lambda n: (0, 0)),
        pl.BlockSpec((1, HW), lambda n: (0, 0)),
    ]

    def prep_w(w, o_p, i_p):
        # OIHW -> (Cout_pad, K*K*Cin_pad), row order (kh*K + kw)*Cin_pad + ci,
        # matching the im2col slab built in the kernel.  Padded rows/cols are zero.
        o_c, i_c, kh, kw = w.shape
        w = jnp.pad(w, ((0, o_p - o_c), (0, i_p - i_c), (0, 0), (0, 0)))
        return jnp.transpose(w, (0, 2, 3, 1)).reshape(o_p, kh * kw * i_p)

    def prep_b(b, o_p):
        return jnp.pad(b, (0, o_p - b.shape[0])).reshape(o_p, 1)

    block_cfgs = []
    in_c, in_p = C, cin_p
    for i, (w1, b1, w2, b2, wd, bd) in enumerate(params_list):
        out_c = w1.shape[0]
        out_p = rup8(out_c)
        blk_args = [
            prep_w(w1, out_p, in_p), prep_b(b1, out_p),
            prep_w(w2, out_p, out_p), prep_b(b2, out_p),
        ]
        has_ds = wd is not None
        if has_ds:
            blk_args += [prep_w(wd, out_p, in_p), prep_b(bd, out_p)]  # (out_p, in_p)
        for a in blk_args:
            args.append(a)
            in_specs.append(pl.BlockSpec(a.shape, lambda n: (0, 0)))
        block_cfgs.append((2 ** i, has_ds))
        in_c, in_p = out_c, out_p

    kernel = _make_net_kernel(tuple(block_cfgs), K, W)
    out = pl.pallas_call(
        kernel,
        out_shape=jax.ShapeDtypeStruct((N, in_p, HW), jnp.float32),
        grid=(N,),
        in_specs=in_specs,
        out_specs=pl.BlockSpec((None, in_p, HW), lambda n: (n, 0, 0)),
        compiler_params=pltpu.CompilerParams(dimension_semantics=("parallel",)),
    )(*args)

    return out[:, :in_c, :].reshape(N, in_c, H, W)


def init_params(key, num_inputs, num_channels, kernel_size):
    """Deterministic synthetic parameters matching the torch module (OIHW layout)."""
    params = []
    for i, out_c in enumerate(num_channels):
        in_c = num_inputs if i == 0 else num_channels[i - 1]
        key, k1, k2, k3, kb1, kb2, kb3 = jax.random.split(key, 7)
        # conv weights ~ N(0, 0.01) as in init_weights().
        w1 = 0.01 * jax.random.normal(k1, (out_c, in_c, kernel_size, kernel_size), jnp.float32)
        w2 = 0.01 * jax.random.normal(k2, (out_c, out_c, kernel_size, kernel_size), jnp.float32)
        # conv biases ~ U(-1/sqrt(fan_in), 1/sqrt(fan_in)) (PyTorch default, not re-inited).
        fan1 = in_c * kernel_size * kernel_size
        fan2 = out_c * kernel_size * kernel_size
        b1 = jax.random.uniform(kb1, (out_c,), jnp.float32, -1.0, 1.0) / jnp.sqrt(fan1)
        b2 = jax.random.uniform(kb2, (out_c,), jnp.float32, -1.0, 1.0) / jnp.sqrt(fan2)
        if in_c != out_c:
            wd = 0.01 * jax.random.normal(k3, (out_c, in_c, 1, 1), jnp.float32)
            bd = jax.random.uniform(kb3, (out_c,), jnp.float32, -1.0, 1.0) / jnp.sqrt(in_c)
        else:
            wd, bd = None, None
        params.append((w1, b1, w2, b2, wd, bd))
    return params


# ----- pure-JAX reference (correctness cross-check only) -----
def _ref_conv(x, w, b, dilation):
    p = (w.shape[-1] - 1) * dilation
    y = lax.conv_general_dilated(
        x, w, window_strides=(1, 1), padding=((p, 0), (p, 0)),
        rhs_dilation=(dilation, dilation),
        dimension_numbers=("NCHW", "OIHW", "NCHW"))
    return y + b.reshape(1, -1, 1, 1)


def _ref_block(x, params, dilation):
    w1, b1, w2, b2, wd, bd = params
    o = jax.nn.relu(_ref_conv(x, w1, b1, dilation))
    o = jax.nn.relu(_ref_conv(o, w2, b2, dilation))
    res = x if wd is None else _ref_conv(x, wd, bd, 1)
    return jax.nn.relu(o + res)


if __name__ == "__main__":
    key = jax.random.PRNGKey(0)
    kx, kp = jax.random.split(key)

    # Small shapes consistent with the module: NCHW input (N=2, C=4, H=W=16),
    # TemporalConvNet2D(num_inputs=4, num_channels=[8, 8], kernel_size=3).
    N, C, H, W = 2, 4, 16, 16
    num_channels = (8, 8)
    kernel_size = 3

    x = jax.random.normal(kx, (N, C, H, W), jnp.float32)      # torch-style NCHW
    params = init_params(kp, C, num_channels, kernel_size)

    y = temporal_conv_net_2d(x, params, kernel_size)
    y = jax.block_until_ready(y)

    # Cross-check against a pure-JAX reference of the same semantics.
    y_ref = x
    for i, p_ in enumerate(params):
        y_ref = _ref_block(y_ref, p_, 2 ** i)
    max_err = float(jnp.max(jnp.abs(y - y_ref)))
    assert jnp.allclose(y, y_ref, atol=1e-4, rtol=1e-4), max_err

    print("KERNEL_OK")
</pallas_src>

<mosaic_0001>
module attributes {stable_mosaic.version = 11 : i64} {
  func.func @kernel(%arg0: i32, %arg1: memref<1x8x256xf32, #tpu.memory_space<vmem>>, %arg2: memref<1x256xi32, #tpu.memory_space<vmem>>, %arg3: memref<1x256xi32, #tpu.memory_space<vmem>>, %arg4: memref<8x72xf32, #tpu.memory_space<vmem>>, %arg5: memref<8x1xf32, #tpu.memory_space<vmem>>, %arg6: memref<8x72xf32, #tpu.memory_space<vmem>>, %arg7: memref<8x1xf32, #tpu.memory_space<vmem>>, %arg8: memref<8x8xf32, #tpu.memory_space<vmem>>, %arg9: memref<8x1xf32, #tpu.memory_space<vmem>>, %arg10: memref<8x72xf32, #tpu.memory_space<vmem>>, %arg11: memref<8x1xf32, #tpu.memory_space<vmem>>, %arg12: memref<8x72xf32, #tpu.memory_space<vmem>>, %arg13: memref<8x1xf32, #tpu.memory_space<vmem>>, %arg14: memref<1x8x256xf32, #tpu.memory_space<vmem>>) attributes {dimension_semantics = [#tpu.dimension_semantics<parallel>], iteration_bounds = array<i64: 2>, scalar_prefetch = 0 : i64, scratch_operands = 0 : i64, tpu.core_type = #tpu.core_type<tc>, window_params = [{transform_indices = @transform_0, window_bounds = array<i64: 1, 8, 256>}, {pipeline_mode = #tpu.pipeline_mode<synchronous>, transform_indices = @transform_1, window_bounds = array<i64: 1, 256>}, {pipeline_mode = #tpu.pipeline_mode<synchronous>, transform_indices = @transform_2, window_bounds = array<i64: 1, 256>}, {pipeline_mode = #tpu.pipeline_mode<synchronous>, transform_indices = @transform_3, window_bounds = array<i64: 8, 72>}, {pipeline_mode = #tpu.pipeline_mode<synchronous>, transform_indices = @transform_4, window_bounds = array<i64: 8, 1>}, {pipeline_mode = #tpu.pipeline_mode<synchronous>, transform_indices = @transform_5, window_bounds = array<i64: 8, 72>}, {pipeline_mode = #tpu.pipeline_mode<synchronous>, transform_indices = @transform_6, window_bounds = array<i64: 8, 1>}, {pipeline_mode = #tpu.pipeline_mode<synchronous>, transform_indices = @transform_7, window_bounds = array<i64: 8, 8>}, {pipeline_mode = #tpu.pipeline_mode<synchronous>, transform_indices = @transform_8, window_bounds = array<i64: 8, 1>}, {pipeline_mode = #tpu.pipeline_mode<synchronous>, transform_indices = @transform_9, window_bounds = array<i64: 8, 72>}, {pipeline_mode = #tpu.pipeline_mode<synchronous>, transform_indices = @transform_10, window_bounds = array<i64: 8, 1>}, {pipeline_mode = #tpu.pipeline_mode<synchronous>, transform_indices = @transform_11, window_bounds = array<i64: 8, 72>}, {pipeline_mode = #tpu.pipeline_mode<synchronous>, transform_indices = @transform_12, window_bounds = array<i64: 8, 1>}, {transform_indices = @transform_13, window_bounds = array<i64: 1, 8, 256>}]} {
    %c0 = arith.constant 0 : index
    %c0_0 = arith.constant 0 : index
    %0 = vector.load %arg2[%c0, %c0_0] : memref<1x256xi32, #tpu.memory_space<vmem>>, vector<1x256xi32>
    %c0_1 = arith.constant 0 : index
    %c0_2 = arith.constant 0 : index
    %1 = vector.load %arg3[%c0_1, %c0_2] : memref<1x256xi32, #tpu.memory_space<vmem>>, vector<1x256xi32>
    %c0_3 = arith.constant 0 : index
    %c0_4 = arith.constant 0 : index
    %c0_5 = arith.constant 0 : index
    %2 = vector.load %arg1[%c0_3, %c0_4, %c0_5] : memref<1x8x256xf32, #tpu.memory_space<vmem>>, vector<1x8x256xf32>
    %3 = vector.shape_cast %2 : vector<1x8x256xf32> to vector<8x256xf32>
    %c0_6 = arith.constant 0 : index
    %c0_7 = arith.constant 0 : index
    %4 = vector.load %arg4[%c0_6, %c0_7] : memref<8x72xf32, #tpu.memory_space<vmem>>, vector<8x72xf32>
    %c0_8 = arith.constant 0 : index
    %c0_9 = arith.constant 0 : index
    %5 = vector.load %arg5[%c0_8, %c0_9] : memref<8x1xf32, #tpu.memory_space<vmem>>, vector<8x1xf32>
    %c0_10 = arith.constant 0 : index
    %c0_11 = arith.constant 0 : index
    %6 = vector.load %arg6[%c0_10, %c0_11] : memref<8x72xf32, #tpu.memory_space<vmem>>, vector<8x72xf32>
    %c0_12 = arith.constant 0 : index
    %c0_13 = arith.constant 0 : index
    %7 = vector.load %arg7[%c0_12, %c0_13] : memref<8x1xf32, #tpu.memory_space<vmem>>, vector<8x1xf32>
    %c0_14 = arith.constant 0 : index
    %c0_15 = arith.constant 0 : index
    %8 = vector.load %arg8[%c0_14, %c0_15] : memref<8x8xf32, #tpu.memory_space<vmem>>, vector<8x8xf32>
    %c0_16 = arith.constant 0 : index
    %c0_17 = arith.constant 0 : index
    %9 = vector.load %arg9[%c0_16, %c0_17] : memref<8x1xf32, #tpu.memory_space<vmem>>, vector<8x1xf32>
    %cst = arith.constant dense<0.000000e+00> : vector<8x256xf32>
    %10 = tpu.matmul %8, %3, %cst {dimension_numbers = #tpu.dot_dimension_numbers<[1], [0], [0], [1], [0, 0, 1, 1], [], []>} : vector<8x8xf32>, vector<8x256xf32>, vector<8x256xf32> -> vector<8x256xf32>
    %11 = vector.broadcast %9 : vector<8x1xf32> to vector<8x256xf32>
    %12 = arith.addf %10, %11 : vector<8x256xf32>
    %c34_i32 = arith.constant 34 : i32
    %13 = tpu.dynamic_rotate %3 by %c34_i32 dim 1 : vector<8x256xf32>, i32 -> vector<8x256xf32>
    %c2_i32 = arith.constant 2 : i32
    %14 = vector.broadcast %c2_i32 : i32 to vector<1x256xi32>
    %15 = arith.cmpi sge, %0, %14 : vector<1x256xi32>
    %c2_i32_18 = arith.constant 2 : i32
    %16 = vector.broadcast %c2_i32_18 : i32 to vector<1x256xi32>
    %17 = arith.cmpi sge, %1, %16 : vector<1x256xi32>
    %18 = arith.andi %15, %17 : vector<1x256xi1>
    %19 = arith.extui %18 : vector<1x256xi1> to vector<1x256xi32>
    %20 = arith.sitofp %19 : vector<1x256xi32> to vector<1x256xf32>
    %21 = vector.broadcast %20 : vector<1x256xf32> to vector<8x256xf32>
    %22 = arith.mulf %13, %21 : vector<8x256xf32>
    %c33_i32 = arith.constant 33 : i32
    %23 = tpu.dynamic_rotate %3 by %c33_i32 dim 1 : vector<8x256xf32>, i32 -> vector<8x256xf32>
    %c2_i32_19 = arith.constant 2 : i32
    %24 = vector.broadcast %c2_i32_19 : i32 to vector<1x256xi32>
    %25 = arith.cmpi sge, %0, %24 : vector<1x256xi32>
    %c1_i32 = arith.constant 1 : i32
    %26 = vector.broadcast %c1_i32 : i32 to vector<1x256xi32>
    %27 = arith.cmpi sge, %1, %26 : vector<1x256xi32>
    %28 = arith.andi %25, %27 : vector<1x256xi1>
    %29 = arith.extui %28 : vector<1x256xi1> to vector<1x256xi32>
    %30 = arith.sitofp %29 : vector<1x256xi32> to vector<1x256xf32>
    %31 = vector.broadcast %30 : vector<1x256xf32> to vector<8x256xf32>
    %32 = arith.mulf %23, %31 : vector<8x256xf32>
    %c32_i32 = arith.constant 32 : i32
    %33 = tpu.dynamic_rotate %3 by %c32_i32 dim 1 : vector<8x256xf32>, i32 -> vector<8x256xf32>
    %c2_i32_20 = arith.constant 2 : i32
    %34 = vector.broadcast %c2_i32_20 : i32 to vector<1x256xi32>
    %35 = arith.cmpi sge, %0, %34 : vector<1x256xi32>
    %c0_i32 = arith.constant 0 : i32
    %36 = vector.broadcast %c0_i32 : i32 to vector<1x256xi32>
    %37 = arith.cmpi sge, %1, %36 : vector<1x256xi32>
    %38 = arith.andi %35, %37 : vector<1x256xi1>
    %39 = arith.extui %38 : vector<1x256xi1> to vector<1x256xi32>
    %40 = arith.sitofp %39 : vector<1x256xi32> to vector<1x256xf32>
    %41 = vector.broadcast %40 : vector<1x256xf32> to vector<8x256xf32>
    %42 = arith.mulf %33, %41 : vector<8x256xf32>
    %c18_i32 = arith.constant 18 : i32
    %43 = tpu.dynamic_rotate %3 by %c18_i32 dim 1 : vector<8x256xf32>, i32 -> vector<8x256xf32>
    %c1_i32_21 = arith.constant 1 : i32
    %44 = vector.broadcast %c1_i32_21 : i32 to vector<1x256xi32>
    %45 = arith.cmpi sge, %0, %44 : vector<1x256xi32>
    %c2_i32_22 = arith.constant 2 : i32
    %46 = vector.broadcast %c2_i32_22 : i32 to vector<1x256xi32>
    %47 = arith.cmpi sge, %1, %46 : vector<1x256xi32>
    %48 = arith.andi %45, %47 : vector<1x256xi1>
    %49 = arith.extui %48 : vector<1x256xi1> to vector<1x256xi32>
    %50 = arith.sitofp %49 : vector<1x256xi32> to vector<1x256xf32>
    %51 = vector.broadcast %50 : vector<1x256xf32> to vector<8x256xf32>
    %52 = arith.mulf %43, %51 : vector<8x256xf32>
    %c17_i32 = arith.constant 17 : i32
    %53 = tpu.dynamic_rotate %3 by %c17_i32 dim 1 : vector<8x256xf32>, i32 -> vector<8x256xf32>
    %c1_i32_23 = arith.constant 1 : i32
    %54 = vector.broadcast %c1_i32_23 : i32 to vector<1x256xi32>
    %55 = arith.cmpi sge, %0, %54 : vector<1x256xi32>
    %c1_i32_24 = arith.constant 1 : i32
    %56 = vector.broadcast %c1_i32_24 : i32 to vector<1x256xi32>
    %57 = arith.cmpi sge, %1, %56 : vector<1x256xi32>
    %58 = arith.andi %55, %57 : vector<1x256xi1>
    %59 = arith.extui %58 : vector<1x256xi1> to vector<1x256xi32>
    %60 = arith.sitofp %59 : vector<1x256xi32> to vector<1x256xf32>
    %61 = vector.broadcast %60 : vector<1x256xf32> to vector<8x256xf32>
    %62 = arith.mulf %53, %61 : vector<8x256xf32>
    %c16_i32 = arith.constant 16 : i32
    %63 = tpu.dynamic_rotate %3 by %c16_i32 dim 1 : vector<8x256xf32>, i32 -> vector<8x256xf32>
    %c1_i32_25 = arith.constant 1 : i32
    %64 = vector.broadcast %c1_i32_25 : i32 to vector<1x256xi32>
    %65 = arith.cmpi sge, %0, %64 : vector<1x256xi32>
    %c0_i32_26 = arith.constant 0 : i32
    %66 = vector.broadcast %c0_i32_26 : i32 to vector<1x256xi32>
    %67 = arith.cmpi sge, %1, %66 : vector<1x256xi32>
    %68 = arith.andi %65, %67 : vector<1x256xi1>
    %69 = arith.extui %68 : vector<1x256xi1> to vector<1x256xi32>
    %70 = arith.sitofp %69 : vector<1x256xi32> to vector<1x256xf32>
    %71 = vector.broadcast %70 : vector<1x256xf32> to vector<8x256xf32>
    %72 = arith.mulf %63, %71 : vector<8x256xf32>
    %c2_i32_27 = arith.constant 2 : i32
    %73 = tpu.dynamic_rotate %3 by %c2_i32_27 dim 1 : vector<8x256xf32>, i32 -> vector<8x256xf32>
    %c0_i32_28 = arith.constant 0 : i32
    %74 = vector.broadcast %c0_i32_28 : i32 to vector<1x256xi32>
    %75 = arith.cmpi sge, %0, %74 : vector<1x256xi32>
    %c2_i32_29 = arith.constant 2 : i32
    %76 = vector.broadcast %c2_i32_29 : i32 to vector<1x256xi32>
    %77 = arith.cmpi sge, %1, %76 : vector<1x256xi32>
    %78 = arith.andi %75, %77 : vector<1x256xi1>
    %79 = arith.extui %78 : vector<1x256xi1> to vector<1x256xi32>
    %80 = arith.sitofp %79 : vector<1x256xi32> to vector<1x256xf32>
    %81 = vector.broadcast %80 : vector<1x256xf32> to vector<8x256xf32>
    %82 = arith.mulf %73, %81 : vector<8x256xf32>
    %c1_i32_30 = arith.constant 1 : i32
    %83 = tpu.dynamic_rotate %3 by %c1_i32_30 dim 1 : vector<8x256xf32>, i32 -> vector<8x256xf32>
    %c0_i32_31 = arith.constant 0 : i32
    %84 = vector.broadcast %c0_i32_31 : i32 to vector<1x256xi32>
    %85 = arith.cmpi sge, %0, %84 : vector<1x256xi32>
    %c1_i32_32 = arith.constant 1 : i32
    %86 = vector.broadcast %c1_i32_32 : i32 to vector<1x256xi32>
    %87 = arith.cmpi sge, %1, %86 : vector<1x256xi32>
    %88 = arith.andi %85, %87 : vector<1x256xi1>
    %89 = arith.extui %88 : vector<1x256xi1> to vector<1x256xi32>
    %90 = arith.sitofp %89 : vector<1x256xi32> to vector<1x256xf32>
    %91 = vector.broadcast %90 : vector<1x256xf32> to vector<8x256xf32>
    %92 = arith.mulf %83, %91 : vector<8x256xf32>
    %93 = tpu.concatenate %22, %32, %42, %52, %62, %72, %82, %92, %3 in 0 : vector<8x256xf32>, vector<8x256xf32>, vector<8x256xf32>, vector<8x256xf32>, vector<8x256xf32>, vector<8x256xf32>, vector<8x256xf32>, vector<8x256xf32>, vector<8x256xf32> -> vector<72x256xf32>
    %cst_33 = arith.constant dense<0.000000e+00> : vector<8x256xf32>
    %94 = tpu.matmul %4, %93, %cst_33 {dimension_numbers = #tpu.dot_dimension_numbers<[1], [0], [0], [1], [0, 0, 1, 1], [], []>} : vector<8x72xf32>, vector<72x256xf32>, vector<8x256xf32> -> vector<8x256xf32>
    %95 = vector.broadcast %5 : vector<8x1xf32> to vector<8x256xf32>
    %96 = arith.addf %94, %95 : vector<8x256xf32>
    %cst_34 = arith.constant 0.000000e+00 : f32
    %97 = vector.broadcast %cst_34 : f32 to vector<8x256xf32>
    %98 = arith.maximumf %96, %97 : vector<8x256xf32>
    %c34_i32_35 = arith.constant 34 : i32
    %99 = tpu.dynamic_rotate %98 by %c34_i32_35 dim 1 : vector<8x256xf32>, i32 -> vector<8x256xf32>
    %c2_i32_36 = arith.constant 2 : i32
    %100 = vector.broadcast %c2_i32_36 : i32 to vector<1x256xi32>
    %101 = arith.cmpi sge, %0, %100 : vector<1x256xi32>
    %c2_i32_37 = arith.constant 2 : i32
    %102 = vector.broadcast %c2_i32_37 : i32 to vector<1x256xi32>
    %103 = arith.cmpi sge, %1, %102 : vector<1x256xi32>
    %104 = arith.andi %101, %103 : vector<1x256xi1>
    %105 = arith.extui %104 : vector<1x256xi1> to vector<1x256xi32>
    %106 = arith.sitofp %105 : vector<1x256xi32> to vector<1x256xf32>
    %107 = vector.broadcast %106 : vector<1x256xf32> to vector<8x256xf32>
    %108 = arith.mulf %99, %107 : vector<8x256xf32>
    %c33_i32_38 = arith.constant 33 : i32
    %109 = tpu.dynamic_rotate %98 by %c33_i32_38 dim 1 : vector<8x256xf32>, i32 -> vector<8x256xf32>
    %c2_i32_39 = arith.constant 2 : i32
    %110 = vector.broadcast %c2_i32_39 : i32 to vector<1x256xi32>
    %111 = arith.cmpi sge, %0, %110 : vector<1x256xi32>
    %c1_i32_40 = arith.constant 1 : i32
    %112 = vector.broadcast %c1_i32_40 : i32 to vector<1x256xi32>
    %113 = arith.cmpi sge, %1, %112 : vector<1x256xi32>
    %114 = arith.andi %111, %113 : vector<1x256xi1>
    %115 = arith.extui %114 : vector<1x256xi1> to vector<1x256xi32>
    %116 = arith.sitofp %115 : vector<1x256xi32> to vector<1x256xf32>
    %117 = vector.broadcast %116 : vector<1x256xf32> to vector<8x256xf32>
    %118 = arith.mulf %109, %117 : vector<8x256xf32>
    %c32_i32_41 = arith.constant 32 : i32
    %119 = tpu.dynamic_rotate %98 by %c32_i32_41 dim 1 : vector<8x256xf32>, i32 -> vector<8x256xf32>
    %c2_i32_42 = arith.constant 2 : i32
    %120 = vector.broadcast %c2_i32_42 : i32 to vector<1x256xi32>
    %121 = arith.cmpi sge, %0, %120 : vector<1x256xi32>
    %c0_i32_43 = arith.constant 0 : i32
    %122 = vector.broadcast %c0_i32_43 : i32 to vector<1x256xi32>
    %123 = arith.cmpi sge, %1, %122 : vector<1x256xi32>
    %124 = arith.andi %121, %123 : vector<1x256xi1>
    %125 = arith.extui %124 : vector<1x256xi1> to vector<1x256xi32>
    %126 = arith.sitofp %125 : vector<1x256xi32> to vector<1x256xf32>
    %127 = vector.broadcast %126 : vector<1x256xf32> to vector<8x256xf32>
    %128 = arith.mulf %119, %127 : vector<8x256xf32>
    %c18_i32_44 = arith.constant 18 : i32
    %129 = tpu.dynamic_rotate %98 by %c18_i32_44 dim 1 : vector<8x256xf32>, i32 -> vector<8x256xf32>
    %c1_i32_45 = arith.constant 1 : i32
    %130 = vector.broadcast %c1_i32_45 : i32 to vector<1x256xi32>
    %131 = arith.cmpi sge, %0, %130 : vector<1x256xi32>
    %c2_i32_46 = arith.constant 2 : i32
    %132 = vector.broadcast %c2_i32_46 : i32 to vector<1x256xi32>
    %133 = arith.cmpi sge, %1, %132 : vector<1x256xi32>
    %134 = arith.andi %131, %133 : vector<1x256xi1>
    %135 = arith.extui %134 : vector<1x256xi1> to vector<1x256xi32>
    %136 = arith.sitofp %135 : vector<1x256xi32> to vector<1x256xf32>
    %137 = vector.broadcast %136 : vector<1x256xf32> to vector<8x256xf32>
    %138 = arith.mulf %129, %137 : vector<8x256xf32>
    %c17_i32_47 = arith.constant 17 : i32
    %139 = tpu.dynamic_rotate %98 by %c17_i32_47 dim 1 : vector<8x256xf32>, i32 -> vector<8x256xf32>
    %c1_i32_48 = arith.constant 1 : i32
    %140 = vector.broadcast %c1_i32_48 : i32 to vector<1x256xi32>
    %141 = arith.cmpi sge, %0, %140 : vector<1x256xi32>
    %c1_i32_49 = arith.constant 1 : i32
    %142 = vector.broadcast %c1_i32_49 : i32 to vector<1x256xi32>
    %143 = arith.cmpi sge, %1, %142 : vector<1x256xi32>
    %144 = arith.andi %141, %143 : vector<1x256xi1>
    %145 = arith.extui %144 : vector<1x256xi1> to vector<1x256xi32>
    %146 = arith.sitofp %145 : vector<1x256xi32> to vector<1x256xf32>
    %147 = vector.broadcast %146 : vector<1x256xf32> to vector<8x256xf32>
    %148 = arith.mulf %139, %147 : vector<8x256xf32>
    %c16_i32_50 = arith.constant 16 : i32
    %149 = tpu.dynamic_rotate %98 by %c16_i32_50 dim 1 : vector<8x256xf32>, i32 -> vector<8x256xf32>
    %c1_i32_51 = arith.constant 1 : i32
    %150 = vector.broadcast %c1_i32_51 : i32 to vector<1x256xi32>
    %151 = arith.cmpi sge, %0, %150 : vector<1x256xi32>
    %c0_i32_52 = arith.constant 0 : i32
    %152 = vector.broadcast %c0_i32_52 : i32 to vector<1x256xi32>
    %153 = arith.cmpi sge, %1, %152 : vector<1x256xi32>
    %154 = arith.andi %151, %153 : vector<1x256xi1>
    %155 = arith.extui %154 : vector<1x256xi1> to vector<1x256xi32>
    %156 = arith.sitofp %155 : vector<1x256xi32> to vector<1x256xf32>
    %157 = vector.broadcast %156 : vector<1x256xf32> to vector<8x256xf32>
    %158 = arith.mulf %149, %157 : vector<8x256xf32>
    %c2_i32_53 = arith.constant 2 : i32
    %159 = tpu.dynamic_rotate %98 by %c2_i32_53 dim 1 : vector<8x256xf32>, i32 -> vector<8x256xf32>
    %c0_i32_54 = arith.constant 0 : i32
    %160 = vector.broadcast %c0_i32_54 : i32 to vector<1x256xi32>
    %161 = arith.cmpi sge, %0, %160 : vector<1x256xi32>
    %c2_i32_55 = arith.constant 2 : i32
    %162 = vector.broadcast %c2_i32_55 : i32 to vector<1x256xi32>
    %163 = arith.cmpi sge, %1, %162 : vector<1x256xi32>
    %164 = arith.andi %161, %163 : vector<1x256xi1>
    %165 = arith.extui %164 : vector<1x256xi1> to vector<1x256xi32>
    %166 = arith.sitofp %165 : vector<1x256xi32> to vector<1x256xf32>
    %167 = vector.broadcast %166 : vector<1x256xf32> to vector<8x256xf32>
    %168 = arith.mulf %159, %167 : vector<8x256xf32>
    %c1_i32_56 = arith.constant 1 : i32
    %169 = tpu.dynamic_rotate %98 by %c1_i32_56 dim 1 : vector<8x256xf32>, i32 -> vector<8x256xf32>
    %c0_i32_57 = arith.constant 0 : i32
    %170 = vector.broadcast %c0_i32_57 : i32 to vector<1x256xi32>
    %171 = arith.cmpi sge, %0, %170 : vector<1x256xi32>
    %c1_i32_58 = arith.constant 1 : i32
    %172 = vector.broadcast %c1_i32_58 : i32 to vector<1x256xi32>
    %173 = arith.cmpi sge, %1, %172 : vector<1x256xi32>
    %174 = arith.andi %171, %173 : vector<1x256xi1>
    %175 = arith.extui %174 : vector<1x256xi1> to vector<1x256xi32>
    %176 = arith.sitofp %175 : vector<1x256xi32> to vector<1x256xf32>
    %177 = vector.broadcast %176 : vector<1x256xf32> to vector<8x256xf32>
    %178 = arith.mulf %169, %177 : vector<8x256xf32>
    %179 = tpu.concatenate %108, %118, %128, %138, %148, %158, %168, %178, %98 in 0 : vector<8x256xf32>, vector<8x256xf32>, vector<8x256xf32>, vector<8x256xf32>, vector<8x256xf32>, vector<8x256xf32>, vector<8x256xf32>, vector<8x256xf32>, vector<8x256xf32> -> vector<72x256xf32>
    %cst_59 = arith.constant dense<0.000000e+00> : vector<8x256xf32>
    %180 = tpu.matmul %6, %179, %cst_59 {dimension_numbers = #tpu.dot_dimension_numbers<[1], [0], [0], [1], [0, 0, 1, 1], [], []>} : vector<8x72xf32>, vector<72x256xf32>, vector<8x256xf32> -> vector<8x256xf32>
    %181 = vector.broadcast %7 : vector<8x1xf32> to vector<8x256xf32>
    %182 = arith.addf %180, %181 : vector<8x256xf32>
    %cst_60 = arith.constant 0.000000e+00 : f32
    %183 = vector.broadcast %cst_60 : f32 to vector<8x256xf32>
    %184 = arith.maximumf %182, %183 : vector<8x256xf32>
    %185 = arith.addf %184, %12 : vector<8x256xf32>
    %cst_61 = arith.constant 0.000000e+00 : f32
    %186 = vector.broadcast %cst_61 : f32 to vector<8x256xf32>
    %187 = arith.maximumf %185, %186 : vector<8x256xf32>
    %c0_62 = arith.constant 0 : index
    %c0_63 = arith.constant 0 : index
    %188 = vector.load %arg10[%c0_62, %c0_63] : memref<8x72xf32, #tpu.memory_space<vmem>>, vector<8x72xf32>
    %c0_64 = arith.constant 0 : index
    %c0_65 = arith.constant 0 : index
    %189 = vector.load %arg11[%c0_64, %c0_65] : memref<8x1xf32, #tpu.memory_space<vmem>>, vector<8x1xf32>
    %c0_66 = arith.constant 0 : index
    %c0_67 = arith.constant 0 : index
    %190 = vector.load %arg12[%c0_66, %c0_67] : memref<8x72xf32, #tpu.memory_space<vmem>>, vector<8x72xf32>
    %c0_68 = arith.constant 0 : index
    %c0_69 = arith.constant 0 : index
    %191 = vector.load %arg13[%c0_68, %c0_69] : memref<8x1xf32, #tpu.memory_space<vmem>>, vector<8x1xf32>
    %c68_i32 = arith.constant 68 : i32
    %192 = tpu.dynamic_rotate %187 by %c68_i32 dim 1 : vector<8x256xf32>, i32 -> vector<8x256xf32>
    %c4_i32 = arith.constant 4 : i32
    %193 = vector.broadcast %c4_i32 : i32 to vector<1x256xi32>
    %194 = arith.cmpi sge, %0, %193 : vector<1x256xi32>
    %c4_i32_70 = arith.constant 4 : i32
    %195 = vector.broadcast %c4_i32_70 : i32 to vector<1x256xi32>
    %196 = arith.cmpi sge, %1, %195 : vector<1x256xi32>
    %197 = arith.andi %194, %196 : vector<1x256xi1>
    %198 = arith.extui %197 : vector<1x256xi1> to vector<1x256xi32>
    %199 = arith.sitofp %198 : vector<1x256xi32> to vector<1x256xf32>
    %200 = vector.broadcast %199 : vector<1x256xf32> to vector<8x256xf32>
    %201 = arith.mulf %192, %200 : vector<8x256xf32>
    %c66_i32 = arith.constant 66 : i32
    %202 = tpu.dynamic_rotate %187 by %c66_i32 dim 1 : vector<8x256xf32>, i32 -> vector<8x256xf32>
    %c4_i32_71 = arith.constant 4 : i32
    %203 = vector.broadcast %c4_i32_71 : i32 to vector<1x256xi32>
    %204 = arith.cmpi sge, %0, %203 : vector<1x256xi32>
    %c2_i32_72 = arith.constant 2 : i32
    %205 = vector.broadcast %c2_i32_72 : i32 to vector<1x256xi32>
    %206 = arith.cmpi sge, %1, %205 : vector<1x256xi32>
    %207 = arith.andi %204, %206 : vector<1x256xi1>
    %208 = arith.extui %207 : vector<1x256xi1> to vector<1x256xi32>
    %209 = arith.sitofp %208 : vector<1x256xi32> to vector<1x256xf32>
    %210 = vector.broadcast %209 : vector<1x256xf32> to vector<8x256xf32>
    %211 = arith.mulf %202, %210 : vector<8x256xf32>
    %c64_i32 = arith.constant 64 : i32
    %212 = tpu.dynamic_rotate %187 by %c64_i32 dim 1 : vector<8x256xf32>, i32 -> vector<8x256xf32>
    %c4_i32_73 = arith.constant 4 : i32
    %213 = vector.broadcast %c4_i32_73 : i32 to vector<1x256xi32>
    %214 = arith.cmpi sge, %0, %213 : vector<1x256xi32>
    %c0_i32_74 = arith.constant 0 : i32
    %215 = vector.broadcast %c0_i32_74 : i32 to vector<1x256xi32>
    %216 = arith.cmpi sge, %1, %215 : vector<1x256xi32>
    %217 = arith.andi %214, %216 : vector<1x256xi1>
    %218 = arith.extui %217 : vector<1x256xi1> to vector<1x256xi32>
    %219 = arith.sitofp %218 : vector<1x256xi32> to vector<1x256xf32>
    %220 = vector.broadcast %219 : vector<1x256xf32> to vector<8x256xf32>
    %221 = arith.mulf %212, %220 : vector<8x256xf32>
    %c36_i32 = arith.constant 36 : i32
    %222 = tpu.dynamic_rotate %187 by %c36_i32 dim 1 : vector<8x256xf32>, i32 -> vector<8x256xf32>
    %c2_i32_75 = arith.constant 2 : i32
    %223 = vector.broadcast %c2_i32_75 : i32 to vector<1x256xi32>
    %224 = arith.cmpi sge, %0, %223 : vector<1x256xi32>
    %c4_i32_76 = arith.constant 4 : i32
    %225 = vector.broadcast %c4_i32_76 : i32 to vector<1x256xi32>
    %226 = arith.cmpi sge, %1, %225 : vector<1x256xi32>
    %227 = arith.andi %224, %226 : vector<1x256xi1>
    %228 = arith.extui %227 : vector<1x256xi1> to vector<1x256xi32>
    %229 = arith.sitofp %228 : vector<1x256xi32> to vector<1x256xf32>
    %230 = vector.broadcast %229 : vector<1x256xf32> to vector<8x256xf32>
    %231 = arith.mulf %222, %230 : vector<8x256xf32>
    %c34_i32_77 = arith.constant 34 : i32
    %232 = tpu.dynamic_rotate %187 by %c34_i32_77 dim 1 : vector<8x256xf32>, i32 -> vector<8x256xf32>
    %c2_i32_78 = arith.constant 2 : i32
    %233 = vector.broadcast %c2_i32_78 : i32 to vector<1x256xi32>
    %234 = arith.cmpi sge, %0, %233 : vector<1x256xi32>
    %c2_i32_79 = arith.constant 2 : i32
    %235 = vector.broadcast %c2_i32_79 : i32 to vector<1x256xi32>
    %236 = arith.cmpi sge, %1, %235 : vector<1x256xi32>
    %237 = arith.andi %234, %236 : vector<1x256xi1>
    %238 = arith.extui %237 : vector<1x256xi1> to vector<1x256xi32>
    %239 = arith.sitofp %238 : vector<1x256xi32> to vector<1x256xf32>
    %240 = vector.broadcast %239 : vector<1x256xf32> to vector<8x256xf32>
    %241 = arith.mulf %232, %240 : vector<8x256xf32>
    %c32_i32_80 = arith.constant 32 : i32
    %242 = tpu.dynamic_rotate %187 by %c32_i32_80 dim 1 : vector<8x256xf32>, i32 -> vector<8x256xf32>
    %c2_i32_81 = arith.constant 2 : i32
    %243 = vector.broadcast %c2_i32_81 : i32 to vector<1x256xi32>
    %244 = arith.cmpi sge, %0, %243 : vector<1x256xi32>
    %c0_i32_82 = arith.constant 0 : i32
    %245 = vector.broadcast %c0_i32_82 : i32 to vector<1x256xi32>
    %246 = arith.cmpi sge, %1, %245 : vector<1x256xi32>
    %247 = arith.andi %244, %246 : vector<1x256xi1>
    %248 = arith.extui %247 : vector<1x256xi1> to vector<1x256xi32>
    %249 = arith.sitofp %248 : vector<1x256xi32> to vector<1x256xf32>
    %250 = vector.broadcast %249 : vector<1x256xf32> to vector<8x256xf32>
    %251 = arith.mulf %242, %250 : vector<8x256xf32>
    %c4_i32_83 = arith.constant 4 : i32
    %252 = tpu.dynamic_rotate %187 by %c4_i32_83 dim 1 : vector<8x256xf32>, i32 -> vector<8x256xf32>
    %c0_i32_84 = arith.constant 0 : i32
    %253 = vector.broadcast %c0_i32_84 : i32 to vector<1x256xi32>
    %254 = arith.cmpi sge, %0, %253 : vector<1x256xi32>
    %c4_i32_85 = arith.constant 4 : i32
    %255 = vector.broadcast %c4_i32_85 : i32 to vector<1x256xi32>
    %256 = arith.cmpi sge, %1, %255 : vector<1x256xi32>
    %257 = arith.andi %254, %256 : vector<1x256xi1>
    %258 = arith.extui %257 : vector<1x256xi1> to vector<1x256xi32>
    %259 = arith.sitofp %258 : vector<1x256xi32> to vector<1x256xf32>
    %260 = vector.broadcast %259 : vector<1x256xf32> to vector<8x256xf32>
    %261 = arith.mulf %252, %260 : vector<8x256xf32>
    %c2_i32_86 = arith.constant 2 : i32
    %262 = tpu.dynamic_rotate %187 by %c2_i32_86 dim 1 : vector<8x256xf32>, i32 -> vector<8x256xf32>
    %c0_i32_87 = arith.constant 0 : i32
    %263 = vector.broadcast %c0_i32_87 : i32 to vector<1x256xi32>
    %264 = arith.cmpi sge, %0, %263 : vector<1x256xi32>
    %c2_i32_88 = arith.constant 2 : i32
    %265 = vector.broadcast %c2_i32_88 : i32 to vector<1x256xi32>
    %266 = arith.cmpi sge, %1, %265 : vector<1x256xi32>
    %267 = arith.andi %264, %266 : vector<1x256xi1>
    %268 = arith.extui %267 : vector<1x256xi1> to vector<1x256xi32>
    %269 = arith.sitofp %268 : vector<1x256xi32> to vector<1x256xf32>
    %270 = vector.broadcast %269 : vector<1x256xf32> to vector<8x256xf32>
    %271 = arith.mulf %262, %270 : vector<8x256xf32>
    %272 = tpu.concatenate %201, %211, %221, %231, %241, %251, %261, %271, %187 in 0 : vector<8x256xf32>, vector<8x256xf32>, vector<8x256xf32>, vector<8x256xf32>, vector<8x256xf32>, vector<8x256xf32>, vector<8x256xf32>, vector<8x256xf32>, vector<8x256xf32> -> vector<72x256xf32>
    %cst_89 = arith.constant dense<0.000000e+00> : vector<8x256xf32>
    %273 = tpu.matmul %188, %272, %cst_89 {dimension_numbers = #tpu.dot_dimension_numbers<[1], [0], [0], [1], [0, 0, 1, 1], [], []>} : vector<8x72xf32>, vector<72x256xf32>, vector<8x256xf32> -> vector<8x256xf32>
    %274 = vector.broadcast %189 : vector<8x1xf32> to vector<8x256xf32>
    %275 = arith.addf %273, %274 : vector<8x256xf32>
    %cst_90 = arith.constant 0.000000e+00 : f32
    %276 = vector.broadcast %cst_90 : f32 to vector<8x256xf32>
    %277 = arith.maximumf %275, %276 : vector<8x256xf32>
    %c68_i32_91 = arith.constant 68 : i32
    %278 = tpu.dynamic_rotate %277 by %c68_i32_91 dim 1 : vector<8x256xf32>, i32 -> vector<8x256xf32>
    %c4_i32_92 = arith.constant 4 : i32
    %279 = vector.broadcast %c4_i32_92 : i32 to vector<1x256xi32>
    %280 = arith.cmpi sge, %0, %279 : vector<1x256xi32>
    %c4_i32_93 = arith.constant 4 : i32
    %281 = vector.broadcast %c4_i32_93 : i32 to vector<1x256xi32>
    %282 = arith.cmpi sge, %1, %281 : vector<1x256xi32>
    %283 = arith.andi %280, %282 : vector<1x256xi1>
    %284 = arith.extui %283 : vector<1x256xi1> to vector<1x256xi32>
    %285 = arith.sitofp %284 : vector<1x256xi32> to vector<1x256xf32>
    %286 = vector.broadcast %285 : vector<1x256xf32> to vector<8x256xf32>
    %287 = arith.mulf %278, %286 : vector<8x256xf32>
    %c66_i32_94 = arith.constant 66 : i32
    %288 = tpu.dynamic_rotate %277 by %c66_i32_94 dim 1 : vector<8x256xf32>, i32 -> vector<8x256xf32>
    %c4_i32_95 = arith.constant 4 : i32
    %289 = vector.broadcast %c4_i32_95 : i32 to vector<1x256xi32>
    %290 = arith.cmpi sge, %0, %289 : vector<1x256xi32>
    %c2_i32_96 = arith.constant 2 : i32
    %291 = vector.broadcast %c2_i32_96 : i32 to vector<1x256xi32>
    %292 = arith.cmpi sge, %1, %291 : vector<1x256xi32>
    %293 = arith.andi %290, %292 : vector<1x256xi1>
    %294 = arith.extui %293 : vector<1x256xi1> to vector<1x256xi32>
    %295 = arith.sitofp %294 : vector<1x256xi32> to vector<1x256xf32>
    %296 = vector.broadcast %295 : vector<1x256xf32> to vector<8x256xf32>
    %297 = arith.mulf %288, %296 : vector<8x256xf32>
    %c64_i32_97 = arith.constant 64 : i32
    %298 = tpu.dynamic_rotate %277 by %c64_i32_97 dim 1 : vector<8x256xf32>, i32 -> vector<8x256xf32>
    %c4_i32_98 = arith.constant 4 : i32
    %299 = vector.broadcast %c4_i32_98 : i32 to vector<1x256xi32>
    %300 = arith.cmpi sge, %0, %299 : vector<1x256xi32>
    %c0_i32_99 = arith.constant 0 : i32
    %301 = vector.broadcast %c0_i32_99 : i32 to vector<1x256xi32>
    %302 = arith.cmpi sge, %1, %301 : vector<1x256xi32>
    %303 = arith.andi %300, %302 : vector<1x256xi1>
    %304 = arith.extui %303 : vector<1x256xi1> to vector<1x256xi32>
    %305 = arith.sitofp %304 : vector<1x256xi32> to vector<1x256xf32>
    %306 = vector.broadcast %305 : vector<1x256xf32> to vector<8x256xf32>
    %307 = arith.mulf %298, %306 : vector<8x256xf32>
    %c36_i32_100 = arith.constant 36 : i32
    %308 = tpu.dynamic_rotate %277 by %c36_i32_100 dim 1 : vector<8x256xf32>, i32 -> vector<8x256xf32>
    %c2_i32_101 = arith.constant 2 : i32
    %309 = vector.broadcast %c2_i32_101 : i32 to vector<1x256xi32>
    %310 = arith.cmpi sge, %0, %309 : vector<1x256xi32>
    %c4_i32_102 = arith.constant 4 : i32
    %311 = vector.broadcast %c4_i32_102 : i32 to vector<1x256xi32>
    %312 = arith.cmpi sge, %1, %311 : vector<1x256xi32>
    %313 = arith.andi %310, %312 : vector<1x256xi1>
    %314 = arith.extui %313 : vector<1x256xi1> to vector<1x256xi32>
    %315 = arith.sitofp %314 : vector<1x256xi32> to vector<1x256xf32>
    %316 = vector.broadcast %315 : vector<1x256xf32> to vector<8x256xf32>
    %317 = arith.mulf %308, %316 : vector<8x256xf32>
    %c34_i32_103 = arith.constant 34 : i32
    %318 = tpu.dynamic_rotate %277 by %c34_i32_103 dim 1 : vector<8x256xf32>, i32 -> vector<8x256xf32>
    %c2_i32_104 = arith.constant 2 : i32
    %319 = vector.broadcast %c2_i32_104 : i32 to vector<1x256xi32>
    %320 = arith.cmpi sge, %0, %319 : vector<1x256xi32>
    %c2_i32_105 = arith.constant 2 : i32
    %321 = vector.broadcast %c2_i32_105 : i32 to vector<1x256xi32>
    %322 = arith.cmpi sge, %1, %321 : vector<1x256xi32>
    %323 = arith.andi %320, %322 : vector<1x256xi1>
    %324 = arith.extui %323 : vector<1x256xi1> to vector<1x256xi32>
    %325 = arith.sitofp %324 : vector<1x256xi32> to vector<1x256xf32>
    %326 = vector.broadcast %325 : vector<1x256xf32> to vector<8x256xf32>
    %327 = arith.mulf %318, %326 : vector<8x256xf32>
    %c32_i32_106 = arith.constant 32 : i32
    %328 = tpu.dynamic_rotate %277 by %c32_i32_106 dim 1 : vector<8x256xf32>, i32 -> vector<8x256xf32>
    %c2_i32_107 = arith.constant 2 : i32
    %329 = vector.broadcast %c2_i32_107 : i32 to vector<1x256xi32>
    %330 = arith.cmpi sge, %0, %329 : vector<1x256xi32>
    %c0_i32_108 = arith.constant 0 : i32
    %331 = vector.broadcast %c0_i32_108 : i32 to vector<1x256xi32>
    %332 = arith.cmpi sge, %1, %331 : vector<1x256xi32>
    %333 = arith.andi %330, %332 : vector<1x256xi1>
    %334 = arith.extui %333 : vector<1x256xi1> to vector<1x256xi32>
    %335 = arith.sitofp %334 : vector<1x256xi32> to vector<1x256xf32>
    %336 = vector.broadcast %335 : vector<1x256xf32> to vector<8x256xf32>
    %337 = arith.mulf %328, %336 : vector<8x256xf32>
    %c4_i32_109 = arith.constant 4 : i32
    %338 = tpu.dynamic_rotate %277 by %c4_i32_109 dim 1 : vector<8x256xf32>, i32 -> vector<8x256xf32>
    %c0_i32_110 = arith.constant 0 : i32
    %339 = vector.broadcast %c0_i32_110 : i32 to vector<1x256xi32>
    %340 = arith.cmpi sge, %0, %339 : vector<1x256xi32>
    %c4_i32_111 = arith.constant 4 : i32
    %341 = vector.broadcast %c4_i32_111 : i32 to vector<1x256xi32>
    %342 = arith.cmpi sge, %1, %341 : vector<1x256xi32>
    %343 = arith.andi %340, %342 : vector<1x256xi1>
    %344 = arith.extui %343 : vector<1x256xi1> to vector<1x256xi32>
    %345 = arith.sitofp %344 : vector<1x256xi32> to vector<1x256xf32>
    %346 = vector.broadcast %345 : vector<1x256xf32> to vector<8x256xf32>
    %347 = arith.mulf %338, %346 : vector<8x256xf32>
    %c2_i32_112 = arith.constant 2 : i32
    %348 = tpu.dynamic_rotate %277 by %c2_i32_112 dim 1 : vector<8x256xf32>, i32 -> vector<8x256xf32>
    %c0_i32_113 = arith.constant 0 : i32
    %349 = vector.broadcast %c0_i32_113 : i32 to vector<1x256xi32>
    %350 = arith.cmpi sge, %0, %349 : vector<1x256xi32>
    %c2_i32_114 = arith.constant 2 : i32
    %351 = vector.broadcast %c2_i32_114 : i32 to vector<1x256xi32>
    %352 = arith.cmpi sge, %1, %351 : vector<1x256xi32>
    %353 = arith.andi %350, %352 : vector<1x256xi1>
    %354 = arith.extui %353 : vector<1x256xi1> to vector<1x256xi32>
    %355 = arith.sitofp %354 : vector<1x256xi32> to vector<1x256xf32>
    %356 = vector.broadcast %355 : vector<1x256xf32> to vector<8x256xf32>
    %357 = arith.mulf %348, %356 : vector<8x256xf32>
    %358 = tpu.concatenate %287, %297, %307, %317, %327, %337, %347, %357, %277 in 0 : vector<8x256xf32>, vector<8x256xf32>, vector<8x256xf32>, vector<8x256xf32>, vector<8x256xf32>, vector<8x256xf32>, vector<8x256xf32>, vector<8x256xf32>, vector<8x256xf32> -> vector<72x256xf32>
    %cst_115 = arith.constant dense<0.000000e+00> : vector<8x256xf32>
    %359 = tpu.matmul %190, %358, %cst_115 {dimension_numbers = #tpu.dot_dimension_numbers<[1], [0], [0], [1], [0, 0, 1, 1], [], []>} : vector<8x72xf32>, vector<72x256xf32>, vector<8x256xf32> -> vector<8x256xf32>
    %360 = vector.broadcast %191 : vector<8x1xf32> to vector<8x256xf32>
    %361 = arith.addf %359, %360 : vector<8x256xf32>
    %cst_116 = arith.constant 0.000000e+00 : f32
    %362 = vector.broadcast %cst_116 : f32 to vector<8x256xf32>
    %363 = arith.maximumf %361, %362 : vector<8x256xf32>
    %364 = arith.addf %363, %187 : vector<8x256xf32>
    %cst_117 = arith.constant 0.000000e+00 : f32
    %365 = vector.broadcast %cst_117 : f32 to vector<8x256xf32>
    %366 = arith.maximumf %364, %365 : vector<8x256xf32>
    %c0_118 = arith.constant 0 : index
    %c0_119 = arith.constant 0 : index
    %c0_120 = arith.constant 0 : index
    %367 = vector.load %arg14[%c0_118, %c0_119, %c0_120] : memref<1x8x256xf32, #tpu.memory_space<vmem>>, vector<1x8x256xf32>
    %368 = vector.shape_cast %367 : vector<1x8x256xf32> to vector<8x256xf32>
    %369 = vector.shape_cast %366 : vector<8x256xf32> to vector<1x8x256xf32>
    tpu.vector_store %arg14[%c0_118, %c0_119, %c0_120], %369 {strides = array<i32>} : memref<1x8x256xf32, #tpu.memory_space<vmem>>, vector<1x8x256xf32>,
    return
  }
  func.func @transform_0(%arg0: i32) -> (i32, i32, i32) {
    %c0_i32 = arith.constant 0 : i32
    %c0_i32_0 = arith.constant 0 : i32
    %c0_i32_1 = arith.constant 0 : i32
    return %arg0, %c0_i32, %c0_i32_0 : i32, i32, i32
  }
  func.func @transform_1(%arg0: i32) -> (i32, i32) {
    %c0_i32 = arith.constant 0 : i32
    %c0_i32_0 = arith.constant 0 : i32
    %c0_i32_1 = arith.constant 0 : i32
    return %c0_i32, %c0_i32_0 : i32, i32
  }
  func.func @transform_2(%arg0: i32) -> (i32, i32) {
    %c0_i32 = arith.constant 0 : i32
    %c0_i32_0 = arith.constant 0 : i32
    %c0_i32_1 = arith.constant 0 : i32
    return %c0_i32, %c0_i32_0 : i32, i32
  }
  func.func @transform_3(%arg0: i32) -> (i32, i32) {
    %c0_i32 = arith.constant 0 : i32
    %c0_i32_0 = arith.constant 0 : i32
    %c0_i32_1 = arith.constant 0 : i32
    return %c0_i32, %c0_i32_0 : i32, i32
  }
  func.func @transform_4(%arg0: i32) -> (i32, i32) {
    %c0_i32 = arith.constant 0 : i32
    %c0_i32_0 = arith.constant 0 : i32
    %c0_i32_1 = arith.constant 0 : i32
    return %c0_i32, %c0_i32_0 : i32, i32
  }
  func.func @transform_5(%arg0: i32) -> (i32, i32) {
    %c0_i32 = arith.constant 0 : i32
    %c0_i32_0 = arith.constant 0 : i32
    %c0_i32_1 = arith.constant 0 : i32
    return %c0_i32, %c0_i32_0 : i32, i32
  }
  func.func @transform_6(%arg0: i32) -> (i32, i32) {
    %c0_i32 = arith.constant 0 : i32
    %c0_i32_0 = arith.constant 0 : i32
    %c0_i32_1 = arith.constant 0 : i32
    return %c0_i32, %c0_i32_0 : i32, i32
  }
  func.func @transform_7(%arg0: i32) -> (i32, i32) {
    %c0_i32 = arith.constant 0 : i32
    %c0_i32_0 = arith.constant 0 : i32
    %c0_i32_1 = arith.constant 0 : i32
    return %c0_i32, %c0_i32_0 : i32, i32
  }
  func.func @transform_8(%arg0: i32) -> (i32, i32) {
    %c0_i32 = arith.constant 0 : i32
    %c0_i32_0 = arith.constant 0 : i32
    %c0_i32_1 = arith.constant 0 : i32
    return %c0_i32, %c0_i32_0 : i32, i32
  }
  func.func @transform_9(%arg0: i32) -> (i32, i32) {
    %c0_i32 = arith.constant 0 : i32
    %c0_i32_0 = arith.constant 0 : i32
    %c0_i32_1 = arith.constant 0 : i32
    return %c0_i32, %c0_i32_0 : i32, i32
  }
  func.func @transform_10(%arg0: i32) -> (i32, i32) {
    %c0_i32 = arith.constant 0 : i32
    %c0_i32_0 = arith.constant 0 : i32
    %c0_i32_1 = arith.constant 0 : i32
    return %c0_i32, %c0_i32_0 : i32, i32
  }
  func.func @transform_11(%arg0: i32) -> (i32, i32) {
    %c0_i32 = arith.constant 0 : i32
    %c0_i32_0 = arith.constant 0 : i32
    %c0_i32_1 = arith.constant 0 : i32
    return %c0_i32, %c0_i32_0 : i32, i32
  }
  func.func @transform_12(%arg0: i32) -> (i32, i32) {
    %c0_i32 = arith.constant 0 : i32
    %c0_i32_0 = arith.constant 0 : i32
    %c0_i32_1 = arith.constant 0 : i32
    return %c0_i32, %c0_i32_0 : i32, i32
  }
  func.func @transform_13(%arg0: i32) -> (i32, i32, i32) {
    %c0_i32 = arith.constant 0 : i32
    %c0_i32_0 = arith.constant 0 : i32
    %c0_i32_1 = arith.constant 0 : i32
    return %arg0, %c0_i32, %c0_i32_0 : i32, i32, i32
  }
}

</mosaic_0001>

<llo_original>
// kernel: tpu_custom_call.1
$region0: #{tpu_custom_call.1}
  #allocation0 [shape = 'u32[]', space=smem, size = 0x4, offset = 0x4, fixed_abs, tag = 'smem constant byte address 0x4 - core index']
  #allocation1 [shape = 'u32[144,128]{1,0:T(1,128)}', space=vmem, size = 0x12000, scoped, tag = 'internal scratch']
  %s0 = inlined_call_operand.vmem [shape: f32[2,8,256], index: 0, kind: input, shape index: {}]
  %s1 = inlined_call_operand.hbm [shape: s32[1,256], index: 1, kind: input, shape index: {}]
  %s2 = inlined_call_operand.hbm [shape: s32[1,256], index: 2, kind: input, shape index: {}]
  %s3 = inlined_call_operand.vmem [shape: f32[8,72], index: 3, kind: input, shape index: {}]
  %s4 = inlined_call_operand.vmem [shape: f32[8,1], index: 4, kind: input, shape index: {}]
  %s5 = inlined_call_operand.vmem [shape: f32[8,72], index: 5, kind: input, shape index: {}]
  %s6 = inlined_call_operand.vmem [shape: f32[8,1], index: 6, kind: input, shape index: {}]
  %s7 = inlined_call_operand.vmem [shape: f32[8,8], index: 7, kind: input, shape index: {}]
  %s8 = inlined_call_operand.vmem [shape: f32[8,1], index: 8, kind: input, shape index: {}]
  %s9 = inlined_call_operand.hbm [shape: f32[8,72], index: 9, kind: input, shape index: {}]
  %s10 = inlined_call_operand.vmem [shape: f32[8,1], index: 10, kind: input, shape index: {}]
  %s11 = inlined_call_operand.vmem [shape: f32[8,72], index: 11, kind: input, shape index: {}]
  %s12 = inlined_call_operand.vmem [shape: f32[8,1], index: 12, kind: input, shape index: {}]
  %s13 = inlined_call_operand.hbm [shape: f32[2,8,256], index: 13, kind: output, shape index: {}]
  %s14 = sld [smem:[#allocation0]]
  $region97: #{tpu_custom_call.1} parent=0
    _
  %s16 = ssub.s32 1, %s14
  %s17 = scalar_select 0, %s16, %s14
  $region1: #{tpu_custom_call.1} parent=0
    #allocation2 [shape = 'u8[1024]{0}', space=vmem, size = 0x400, scoped, tag = 'input window, operand 1, single buffered']
    #allocation3 [shape = 's32[2]{0}', space=sflag, size = 0x8, scoped, tag = 'scoped memory for tpu_custom_call.1']
    #allocation4 [shape = 's32[2]{0}', space=sflag, size = 0x8, scoped, tag = 'scoped memory for tpu_custom_call.1']
    #allocation5 [shape = 'u8[1024]{0}', space=vmem, size = 0x400, scoped, tag = 'input window, operand 2, single buffered']
    #allocation6 [shape = 's32[1]{0}', space=sflag, size = 0x4, scoped, tag = 'scoped memory for tpu_custom_call.1']
    #allocation7 [shape = 'u8[4096]{0}', space=vmem, size = 0x1000, scoped, tag = 'input window, operand 9, single buffered']
    #allocation8 [shape = 'u8[16384]{0}', space=vmem, size = 0x4000, scoped, tag = 'output window, operand 0']
    %18 = vsyncpa [#allocation3], 0
    %19 = vsyncpa [#allocation6], 0
    %20 = vsyncpa [#allocation4], 0
    %s21 = scalar_lea.sflag [#allocation4], 1
    %22 = vsyncpa %s21, 0
    loop: start=0, step=1, limit=4
    $region2: #{tpu_custom_call.1} parent=1 // loop_pre_header
      _
    $region3: #{tpu_custom_call.1} parent=1 // loop_header
      %s24 = sphi 0, %s28
      %p25 = scmp.ge.s32.totalorder %s24, 4
      %s34 = sphi 0, %s36
      %s37 = sphi 0, %s34
      %s38 = sphi 0, %s37
      %s54 = sphi 0, %s38
      %s58 = sphi 0, %s58
      %s60 = sphi 0, %s58
      %s61 = sphi 0, %s60
      %s75 = sphi 0, %s61
      %s79 = sphi 0, %s79
      %s81 = sphi 0, %s79
      %s82 = sphi 0, %s81
      %s96 = sphi 0, %s82
      %s100 = sphi 0, %s100
      %s102 = sphi 0, %s100
      %s103 = sphi 0, %s102
      %s117 = sphi 0, %s103
      %s121 = sphi 0, %s121
      %s123 = sphi 0, %s121
      %s124 = sphi 0, %s123
      %s138 = sphi 0, %s124
      %s142 = sphi 0, %s142
      %s144 = sphi 0, %s142
      %s145 = sphi 0, %s144
      %s159 = sphi 0, %s145
      %s163 = sphi 0, %s163
      %s165 = sphi 0, %s163
      %s166 = sphi 0, %s165
      %s180 = sphi 0, %s166
      %s184 = sphi 0, %s184
      %s186 = sphi 0, %s184
      %s187 = sphi 0, %s186
      %s201 = sphi 0, %s187
      %s205 = sphi 0, %s205
      %s207 = sphi 0, %s205
      %s208 = sphi 0, %s207
      %s222 = sphi 0, %s208
      %s226 = sphi 0, %s226
      %s228 = sphi 0, %s226
      %s229 = sphi 0, %s228
      %s243 = sphi 0, %s229
      %s247 = sphi 0, %s247
      %s249 = sphi 0, %s247
      %s250 = sphi 0, %s249
      %s264 = sphi 0, %s250
      %s268 = sphi 0, %s268
      %s270 = sphi 0, %s268
      %s271 = sphi 0, %s270
      %s285 = sphi 0, %s271
      %s289 = sphi 0, %s289
      %s291 = sphi 0, %s289
      %s292 = sphi 0, %s291
      %s306 = sphi 0, %s292
      %s312 = sphi 0, %s314
      %s315 = sphi 0, %s312
      %s316 = sphi 0, %s315
      %s332 = sphi 0, %s316
    $region4: #{tpu_custom_call.1} parent=1 // loop_header_branch
      %27 = sbr.rel (%p25) target = $region8
    $region5: #{tpu_custom_call.1} parent=1 // loop_body
      %s29 = ssub.s32 %s24, 1
      %s30 = ssub.s32 %s24, 2
      %s31 = sadd.s32 %s24, 1
      %s32 = ssub.s32 %s24, %s31
      %p33 = scmp.eq.s32.totalorder %s32, 0
      %s35 = sadd.s32 %s34, 1
      %s36 = scalar_select %p33, %s34, %s35
      %p39 = pneg %p33
      %p40 = scmp.eq.s32.totalorder %s24, 1
      %p41 = por %p39, %p40
      %p42 = scmp.ne.s32.totalorder %s34, %s37
      %p43 = scmp.eq.s32.totalorder %s24, 0
      %p44 = por %p42, %p43
      %p45 = scmp.ne.s32.totalorder %s34, %s37
      %p46 = scmp.eq.s32.totalorder %s29, 1
      %p47 = por %p45, %p46
      %p48 = scmp.ne.s32.totalorder %s37, %s38
      %p49 = scmp.eq.s32.totalorder %s29, 0
      %p50 = por %p48, %p49
      %p51 = scmp.ne.s32.totalorder %s37, %s38
      %p52 = scmp.eq.s32.totalorder %s30, 1
      %p53 = por %p51, %p52
      %p55 = scmp.ne.s32.totalorder %s38, %s54
      %p56 = scmp.eq.s32.totalorder %s30, 0
      %p57 = por %p55, %p56
      %s59 = sadd.s32 %s58, 1
      %p62 = scmp.eq.s32.totalorder %s24, 1
      %p63 = scmp.ne.s32.totalorder %s58, %s60
      %p64 = scmp.eq.s32.totalorder %s24, 0
      %p65 = por %p63, %p64
      %p66 = scmp.ne.s32.totalorder %s58, %s60
      %p67 = scmp.eq.s32.totalorder %s29, 1
      %p68 = por %p66, %p67
      %p69 = scmp.ne.s32.totalorder %s60, %s61
      %p70 = scmp.eq.s32.totalorder %s29, 0
      %p71 = por %p69, %p70
      %p72 = scmp.ne.s32.totalorder %s60, %s61
      %p73 = scmp.eq.s32.totalorder %s30, 1
      %p74 = por %p72, %p73
      %p76 = scmp.ne.s32.totalorder %s61, %s75
      %p77 = scmp.eq.s32.totalorder %s30, 0
      %p78 = por %p76, %p77
      %s80 = sadd.s32 %s79, 1
      %p83 = scmp.eq.s32.totalorder %s24, 1
      %p84 = scmp.ne.s32.totalorder %s79, %s81
      %p85 = scmp.eq.s32.totalorder %s24, 0
      %p86 = por %p84, %p85
      %p87 = scmp.ne.s32.totalorder %s79, %s81
      %p88 = scmp.eq.s32.totalorder %s29, 1
      %p89 = por %p87, %p88
      %p90 = scmp.ne.s32.totalorder %s81, %s82
      %p91 = scmp.eq.s32.totalorder %s29, 0
      %p92 = por %p90, %p91
      %p93 = scmp.ne.s32.totalorder %s81, %s82
      %p94 = scmp.eq.s32.totalorder %s30, 1
      %p95 = por %p93, %p94
      %p97 = scmp.ne.s32.totalorder %s82, %s96
      %p98 = scmp.eq.s32.totalorder %s30, 0
      %p99 = por %p97, %p98
      %s101 = sadd.s32 %s100, 1
      %p104 = scmp.eq.s32.totalorder %s24, 1
      %p105 = scmp.ne.s32.totalorder %s100, %s102
      %p106 = scmp.eq.s32.totalorder %s24, 0
      %p107 = por %p105, %p106
      %p108 = scmp.ne.s32.totalorder %s100, %s102
      %p109 = scmp.eq.s32.totalorder %s29, 1
      %p110 = por %p108, %p109
      %p111 = scmp.ne.s32.totalorder %s102, %s103
      %p112 = scmp.eq.s32.totalorder %s29, 0
      %p113 = por %p111, %p112
      %p114 = scmp.ne.s32.totalorder %s102, %s103
      %p115 = scmp.eq.s32.totalorder %s30, 1
      %p116 = por %p114, %p115
      %p118 = scmp.ne.s32.totalorder %s103, %s117
      %p119 = scmp.eq.s32.totalorder %s30, 0
      %p120 = por %p118, %p119
      %s122 = sadd.s32 %s121, 1
      %p125 = scmp.eq.s32.totalorder %s24, 1
      %p126 = scmp.ne.s32.totalorder %s121, %s123
      %p127 = scmp.eq.s32.totalorder %s24, 0
      %p128 = por %p126, %p127
      %p129 = scmp.ne.s32.totalorder %s121, %s123
      %p130 = scmp.eq.s32.totalorder %s29, 1
      %p131 = por %p129, %p130
      %p132 = scmp.ne.s32.totalorder %s123, %s124
      %p133 = scmp.eq.s32.totalorder %s29, 0
      %p134 = por %p132, %p133
      %p135 = scmp.ne.s32.totalorder %s123, %s124
      %p136 = scmp.eq.s32.totalorder %s30, 1
      %p137 = por %p135, %p136
      %p139 = scmp.ne.s32.totalorder %s124, %s138
      %p140 = scmp.eq.s32.totalorder %s30, 0
      %p141 = por %p139, %p140
      %s143 = sadd.s32 %s142, 1
      %p146 = scmp.eq.s32.totalorder %s24, 1
      %p147 = scmp.ne.s32.totalorder %s142, %s144
      %p148 = scmp.eq.s32.totalorder %s24, 0
      %p149 = por %p147, %p148
      %p150 = scmp.ne.s32.totalorder %s142, %s144
      %p151 = scmp.eq.s32.totalorder %s29, 1
      %p152 = por %p150, %p151
      %p153 = scmp.ne.s32.totalorder %s144, %s145
      %p154 = scmp.eq.s32.totalorder %s29, 0
      %p155 = por %p153, %p154
      %p156 = scmp.ne.s32.totalorder %s144, %s145
      %p157 = scmp.eq.s32.totalorder %s30, 1
      %p158 = por %p156, %p157
      %p160 = scmp.ne.s32.totalorder %s145, %s159
      %p161 = scmp.eq.s32.totalorder %s30, 0
      %p162 = por %p160, %p161
      %s164 = sadd.s32 %s163, 1
      %p167 = scmp.eq.s32.totalorder %s24, 1
      %p168 = scmp.ne.s32.totalorder %s163, %s165
      %p169 = scmp.eq.s32.totalorder %s24, 0
      %p170 = por %p168, %p169
      %p171 = scmp.ne.s32.totalorder %s163, %s165
      %p172 = scmp.eq.s32.totalorder %s29, 1
      %p173 = por %p171, %p172
      %p174 = scmp.ne.s32.totalorder %s165, %s166
      %p175 = scmp.eq.s32.totalorder %s29, 0
      %p176 = por %p174, %p175
      %p177 = scmp.ne.s32.totalorder %s165, %s166
      %p178 = scmp.eq.s32.totalorder %s30, 1
      %p179 = por %p177, %p178
      %p181 = scmp.ne.s32.totalorder %s166, %s180
      %p182 = scmp.eq.s32.totalorder %s30, 0
      %p183 = por %p181, %p182
      %s185 = sadd.s32 %s184, 1
      %p188 = scmp.eq.s32.totalorder %s24, 1
      %p189 = scmp.ne.s32.totalorder %s184, %s186
      %p190 = scmp.eq.s32.totalorder %s24, 0
      %p191 = por %p189, %p190
      %p192 = scmp.ne.s32.totalorder %s184, %s186
      %p193 = scmp.eq.s32.totalorder %s29, 1
      %p194 = por %p192, %p193
      %p195 = scmp.ne.s32.totalorder %s186, %s187
      %p196 = scmp.eq.s32.totalorder %s29, 0
      %p197 = por %p195, %p196
      %p198 = scmp.ne.s32.totalorder %s186, %s187
      %p199 = scmp.eq.s32.totalorder %s30, 1
      %p200 = por %p198, %p199
      %p202 = scmp.ne.s32.totalorder %s187, %s201
      %p203 = scmp.eq.s32.totalorder %s30, 0
      %p204 = por %p202, %p203
      %s206 = sadd.s32 %s205, 1
      %p209 = scmp.eq.s32.totalorder %s24, 1
      %p210 = scmp.ne.s32.totalorder %s205, %s207
      %p211 = scmp.eq.s32.totalorder %s24, 0
      %p212 = por %p210, %p211
      %p213 = scmp.ne.s32.totalorder %s205, %s207
      %p214 = scmp.eq.s32.totalorder %s29, 1
      %p215 = por %p213, %p214
      %p216 = scmp.ne.s32.totalorder %s207, %s208
      %p217 = scmp.eq.s32.totalorder %s29, 0
      %p218 = por %p216, %p217
      %p219 = scmp.ne.s32.totalorder %s207, %s208
      %p220 = scmp.eq.s32.totalorder %s30, 1
      %p221 = por %p219, %p220
      %p223 = scmp.ne.s32.totalorder %s208, %s222
      %p224 = scmp.eq.s32.totalorder %s30, 0
      %p225 = por %p223, %p224
      %s227 = sadd.s32 %s226, 1
      %p230 = scmp.eq.s32.totalorder %s24, 1
      %p231 = scmp.ne.s32.totalorder %s226, %s228
      %p232 = scmp.eq.s32.totalorder %s24, 0
      %p233 = por %p231, %p232
      %p234 = scmp.ne.s32.totalorder %s226, %s228
      %p235 = scmp.eq.s32.totalorder %s29, 1
      %p236 = por %p234, %p235
      %p237 = scmp.ne.s32.totalorder %s228, %s229
      %p238 = scmp.eq.s32.totalorder %s29, 0
      %p239 = por %p237, %p238
      %p240 = scmp.ne.s32.totalorder %s228, %s229
      %p241 = scmp.eq.s32.totalorder %s30, 1
      %p242 = por %p240, %p241
      %p244 = scmp.ne.s32.totalorder %s229, %s243
      %p245 = scmp.eq.s32.totalorder %s30, 0
      %p246 = por %p244, %p245
      %s248 = sadd.s32 %s247, 1
      %p251 = scmp.eq.s32.totalorder %s24, 1
      %p252 = scmp.ne.s32.totalorder %s247, %s249
      %p253 = scmp.eq.s32.totalorder %s24, 0
      %p254 = por %p252, %p253
      %p255 = scmp.ne.s32.totalorder %s247, %s249
      %p256 = scmp.eq.s32.totalorder %s29, 1
      %p257 = por %p255, %p256
      %p258 = scmp.ne.s32.totalorder %s249, %s250
      %p259 = scmp.eq.s32.totalorder %s29, 0
      %p260 = por %p258, %p259
      %p261 = scmp.ne.s32.totalorder %s249, %s250
      %p262 = scmp.eq.s32.totalorder %s30, 1
      %p263 = por %p261, %p262
      %p265 = scmp.ne.s32.totalorder %s250, %s264
      %p266 = scmp.eq.s32.totalorder %s30, 0
      %p267 = por %p265, %p266
      %s269 = sadd.s32 %s268, 1
      %p272 = scmp.eq.s32.totalorder %s24, 1
      %p273 = scmp.ne.s32.totalorder %s268, %s270
      %p274 = scmp.eq.s32.totalorder %s24, 0
      %p275 = por %p273, %p274
      %p276 = scmp.ne.s32.totalorder %s268, %s270
      %p277 = scmp.eq.s32.totalorder %s29, 1
      %p278 = por %p276, %p277
      %p279 = scmp.ne.s32.totalorder %s270, %s271
      %p280 = scmp.eq.s32.totalorder %s29, 0
      %p281 = por %p279, %p280
      %p282 = scmp.ne.s32.totalorder %s270, %s271
      %p283 = scmp.eq.s32.totalorder %s30, 1
      %p284 = por %p282, %p283
      %p286 = scmp.ne.s32.totalorder %s271, %s285
      %p287 = scmp.eq.s32.totalorder %s30, 0
      %p288 = por %p286, %p287
      %s290 = sadd.s32 %s289, 1
      %p293 = scmp.eq.s32.totalorder %s24, 1
      %p294 = scmp.ne.s32.totalorder %s289, %s291
      %p295 = scmp.eq.s32.totalorder %s24, 0
      %p296 = por %p294, %p295
      %p297 = scmp.ne.s32.totalorder %s289, %s291
      %p298 = scmp.eq.s32.totalorder %s29, 1
      %p299 = por %p297, %p298
      %p300 = scmp.ne.s32.totalorder %s291, %s292
      %p301 = scmp.eq.s32.totalorder %s29, 0
      %p302 = por %p300, %p301
      %p303 = scmp.ne.s32.totalorder %s291, %s292
      %p304 = scmp.eq.s32.totalorder %s30, 1
      %p305 = por %p303, %p304
      %p307 = scmp.ne.s32.totalorder %s292, %s306
      %p308 = scmp.eq.s32.totalorder %s30, 0
      %p309 = por %p307, %p308
      %s310 = ssub.s32 %s24, %s31
      %p311 = scmp.eq.s32.totalorder %s310, 0
      %s313 = sadd.s32 %s312, 1
      %s314 = scalar_select %p311, %s312, %s313
      %p317 = pneg %p311
      %p318 = scmp.eq.s32.totalorder %s24, 1
      %p319 = por %p317, %p318
      %p320 = scmp.ne.s32.totalorder %s312, %s315
      %p321 = scmp.eq.s32.totalorder %s24, 0
      %p322 = por %p320, %p321
      %p323 = scmp.ne.s32.totalorder %s312, %s315
      %p324 = scmp.eq.s32.totalorder %s29, 1
      %p325 = por %p323, %p324
      %p326 = scmp.ne.s32.totalorder %s315, %s316
      %p327 = scmp.eq.s32.totalorder %s29, 0
      %p328 = por %p326, %p327
      %p329 = scmp.ne.s32.totalorder %s315, %s316
      %p330 = scmp.eq.s32.totalorder %s30, 1
      %p331 = por %p329, %p330
      %p333 = scmp.ne.s32.totalorder %s316, %s332
      %p334 = scmp.eq.s32.totalorder %s30, 0
      %p335 = por %p333, %p334
      %p336 = scmp.le.s32.totalorder 1, %s24
      %p337 = scmp.lt.s32.totalorder %s24, 3
      %p338 = pnand %p336, %p337
      %p339 = pneg %p338
      // Predicated region
      $region9: #{tpu_custom_call.1} parent=5 // pred_check
        _
      $region10: #{tpu_custom_call.1} parent=5 // pred_check_branch
        %341 = sbr.rel (%p338) target = $region12
      $region11: #{tpu_custom_call.1} parent=5 // pred_region
        %s342 = ssub.s32 %s24, 1
        // Predicated region
        $region13: #{tpu_custom_call.1} parent=11 // pred_check
          %p343 = pneg %p71
        $region14: #{tpu_custom_call.1} parent=11 // pred_check_branch
          %345 = sbr.rel (%p343) target = $region16
        $region15: #{tpu_custom_call.1} parent=11 // pred_region
          %s347 = ssub.s32 32, 32
          %348 = vsyncadd [#allocation3], %s347
          %s350 = sshll.u32 [#allocation2], 4
          %s351 = int_to_ptr.vmem [resolvable:$true] %s350
          %353 = dma.hbm_to_vmem [thread:$0]  %s1, 32, %s351, [#allocation3]
        $region16: #{tpu_custom_call.1} parent=11 // pred_fallthru
          _
        // Predicated region
        $region17: #{tpu_custom_call.1} parent=11 // pred_check
          %p354 = pneg %p92
        $region18: #{tpu_custom_call.1} parent=11 // pred_check_branch
          %356 = sbr.rel (%p354) target = $region20
        $region19: #{tpu_custom_call.1} parent=11 // pred_region
          %s358 = ssub.s32 32, 32
          %359 = vsyncadd [#allocation6], %s358
          %s361 = sshll.u32 [#allocation5], 4
          %s362 = int_to_ptr.vmem [resolvable:$true] %s361
          %364 = dma.hbm_to_vmem [thread:$0]  %s2, 32, %s362, [#allocation6]
        $region20: #{tpu_custom_call.1} parent=11 // pred_fallthru
          _
        // Predicated region
        $region21: #{tpu_custom_call.1} parent=11 // pred_check
          %p365 = pneg %p113
        $region22: #{tpu_custom_call.1} parent=11 // pred_check_branch
          %367 = sbr.rel (%p365) target = $region24
        $region23: #{tpu_custom_call.1} parent=11 // pred_region
          _
        $region24: #{tpu_custom_call.1} parent=11 // pred_fallthru
          _
        // Predicated region
        $region25: #{tpu_custom_call.1} parent=11 // pred_check
          %p368 = pneg %p134
        $region26: #{tpu_custom_call.1} parent=11 // pred_check_branch
          %370 = sbr.rel (%p368) target = $region28
        $region27: #{tpu_custom_call.1} parent=11 // pred_region
          _
        $region28: #{tpu_custom_call.1} parent=11 // pred_fallthru
          _
        // Predicated region
        $region29: #{tpu_custom_call.1} parent=11 // pred_check
          %p371 = pneg %p155
        $region30: #{tpu_custom_call.1} parent=11 // pred_check_branch
          %373 = sbr.rel (%p371) target = $region32
        $region31: #{tpu_custom_call.1} parent=11 // pred_region
          _
        $region32: #{tpu_custom_call.1} parent=11 // pred_fallthru
          _
        // Predicated region
        $region33: #{tpu_custom_call.1} parent=11 // pred_check
          %p374 = pneg %p176
        $region34: #{tpu_custom_call.1} parent=11 // pred_check_branch
          %376 = sbr.rel (%p374) target = $region36
        $region35: #{tpu_custom_call.1} parent=11 // pred_region
          _
        $region36: #{tpu_custom_call.1} parent=11 // pred_fallthru
          _
        // Predicated region
        $region37: #{tpu_custom_call.1} parent=11 // pred_check
          %p377 = pneg %p197
        $region38: #{tpu_custom_call.1} parent=11 // pred_check_branch
          %379 = sbr.rel (%p377) target = $region40
        $region39: #{tpu_custom_call.1} parent=11 // pred_region
          _
        $region40: #{tpu_custom_call.1} parent=11 // pred_fallthru
          _
        // Predicated region
        $region41: #{tpu_custom_call.1} parent=11 // pred_check
          %p380 = pneg %p218
        $region42: #{tpu_custom_call.1} parent=11 // pred_check_branch
          %382 = sbr.rel (%p380) target = $region44
        $region43: #{tpu_custom_call.1} parent=11 // pred_region
          _
        $region44: #{tpu_custom_call.1} parent=11 // pred_fallthru
          _
        // Predicated region
        $region45: #{tpu_custom_call.1} parent=11 // pred_check
          %p383 = pneg %p239
        $region46: #{tpu_custom_call.1} parent=11 // pred_check_branch
          %385 = sbr.rel (%p383) target = $region48
        $region47: #{tpu_custom_call.1} parent=11 // pred_region
          %s387 = ssub.s32 128, 128
          %388 = vsyncadd [#allocation6], %s387
          %s390 = sshll.u32 [#allocation7], 4
          %s391 = int_to_ptr.vmem [resolvable:$true] %s390
          %393 = dma.hbm_to_vmem [thread:$0]  %s9, 128, %s391, [#allocation6]
        $region48: #{tpu_custom_call.1} parent=11 // pred_fallthru
          _
        // Predicated region
        $region49: #{tpu_custom_call.1} parent=11 // pred_check
          %p394 = pneg %p260
        $region50: #{tpu_custom_call.1} parent=11 // pred_check_branch
          %396 = sbr.rel (%p394) target = $region52
        $region51: #{tpu_custom_call.1} parent=11 // pred_region
          _
        $region52: #{tpu_custom_call.1} parent=11 // pred_fallthru
          _
        // Predicated region
        $region53: #{tpu_custom_call.1} parent=11 // pred_check
          %p397 = pneg %p281
        $region54: #{tpu_custom_call.1} parent=11 // pred_check_branch
          %399 = sbr.rel (%p397) target = $region56
        $region55: #{tpu_custom_call.1} parent=11 // pred_region
          _
        $region56: #{tpu_custom_call.1} parent=11 // pred_fallthru
          _
        // Predicated region
        $region57: #{tpu_custom_call.1} parent=11 // pred_check
          %p400 = pneg %p302
        $region58: #{tpu_custom_call.1} parent=11 // pred_check_branch
          %402 = sbr.rel (%p400) target = $region60
        $region59: #{tpu_custom_call.1} parent=11 // pred_region
          _
        $region60: #{tpu_custom_call.1} parent=11 // pred_fallthru
          _
      $region12: #{tpu_custom_call.1} parent=5 // pred_fallthru
        _
      %p403 = scmp.lt.s32.totalorder %s24, 2
      // Predicated region
      $region61: #{tpu_custom_call.1} parent=5 // pred_check
        %p404 = pneg %p403
      $region62: #{tpu_custom_call.1} parent=5 // pred_check_branch
        %406 = sbr.rel (%p404) target = $region64
      $region63: #{tpu_custom_call.1} parent=5 // pred_region
        // Predicated region
        $region65: #{tpu_custom_call.1} parent=63 // pred_check
          %p407 = pneg %p44
        $region66: #{tpu_custom_call.1} parent=63 // pred_check_branch
          %409 = sbr.rel (%p407) target = $region68
        $region67: #{tpu_custom_call.1} parent=63 // pred_region
          %p410 = scmp.lt.s32.totalorder %s24, 1
          %s411 = scalar_select %p410, %s24, 1
          %s412 = smul.addr %s411, 2
          %s413 = smul.addr %s412, 8
          %s414 = scalar_lea.vmem %s0, %s413
        $region68: #{tpu_custom_call.1} parent=63 // pred_fallthru
          _
      $region64: #{tpu_custom_call.1} parent=5 // pred_fallthru
        _
      %p415 = scmp.le.s32.totalorder 1, %s24
      %p416 = scmp.lt.s32.totalorder %s24, 3
      %p417 = pnand %p415, %p416
      %p418 = pneg %p417
      // Predicated region
      $region69: #{tpu_custom_call.1} parent=5 // pred_check
        _
      $region70: #{tpu_custom_call.1} parent=5 // pred_check_branch
        %420 = sbr.rel (%p417) target = $region72
      $region71: #{tpu_custom_call.1} parent=5 // pred_region
        %s421 = ssub.s32 %s24, 1
        // Predicated region
        $region73: #{tpu_custom_call.1} parent=71 // pred_check
          %p422 = pneg %p71
        $region74: #{tpu_custom_call.1} parent=71 // pred_check_branch
          %424 = sbr.rel (%p422) target = $region76
        $region75: #{tpu_custom_call.1} parent=71 // pred_region
          %425 = dma.done [#allocation3], 32
        $region76: #{tpu_custom_call.1} parent=71 // pred_fallthru
          _
        // Predicated region
        $region77: #{tpu_custom_call.1} parent=71 // pred_check
          %p426 = pneg %p92
        $region78: #{tpu_custom_call.1} parent=71 // pred_check_branch
          %428 = sbr.rel (%p426) target = $region80
        $region79: #{tpu_custom_call.1} parent=71 // pred_region
          %429 = dma.done [#allocation6], 32
        $region80: #{tpu_custom_call.1} parent=71 // pred_fallthru
          _
        // Predicated region
        $region81: #{tpu_custom_call.1} parent=71 // pred_check
          %p430 = pneg %p239
        $region82: #{tpu_custom_call.1} parent=71 // pred_check_branch
          %432 = sbr.rel (%p430) target = $region84
        $region83: #{tpu_custom_call.1} parent=71 // pred_region
          %433 = dma.done [#allocation6], 128
        $region84: #{tpu_custom_call.1} parent=71 // pred_fallthru
          _
        %p434 = scmp.lt.s32.totalorder %s29, 1
        %s435 = scalar_select %p434, %s29, 1
        %s436 = smul.addr %s435, 2
        %s437 = smul.addr %s436, 8
        %s438 = scalar_lea.vmem %s0, %s437
        %p439 = pneg %p50
        %p440 = pneg %p47
        %p441 = pneg %p71
        %p442 = pneg %p68
        %p443 = pneg %p92
        %p444 = pneg %p89
        %p445 = pneg %p113
        %p446 = pneg %p110
        %p447 = pneg %p134
        %p448 = pneg %p131
        %p449 = pneg %p155
        %p450 = pneg %p152
        %p451 = pneg %p176
        %p452 = pneg %p173
        %p453 = pneg %p197
        %p454 = pneg %p194
        %p455 = pneg %p218
        %p456 = pneg %p215
        %p457 = pneg %p239
        %p458 = pneg %p236
        %p459 = pneg %p260
        %p460 = pneg %p257
        %p461 = pneg %p281
        %p462 = pneg %p278
        %p463 = pneg %p302
        %p464 = pneg %p299
        %p465 = pneg %p328
        %p466 = pneg %p325
        %s467 = sand.u32 %s315, 1
        %s468 = scalar_lea.sflag [#allocation4], %s467
        %s469 = sand.u32 %s315, 1
        %s470 = smul.addr %s469, 16
        %s471 = scalar_lea.vmem [#allocation8], %s470
        %p472 = scmp.lt.s32.totalorder %s29, 1
        %s473 = scalar_select %p472, %s29, 1
        %s474 = smul.addr %s473, 2
        %s475 = smul.addr %s474, 8
        %s476 = scalar_lea.vmem %s0, %s475
        %v477 = vld [vmem:[#allocation2] sm:$0x3]
        %v478 = vld [vmem:[#allocation5] sm:$0x3]
        %v479 = vld [vmem:[%s476] sm:$0xff]
        %v480 = vld [vmem:[%s476 + $0x8] sm:$0xff]
        %v481 = vld [vmem:[%s3] sm:$0xff]
        %v482 = vld [vmem:[%s4] sm:$0xff]
        %v483 = vld [vmem:[%s5] sm:$0xff]
        %v484 = vld [vmem:[%s6] sm:$0xff]
        %v485 = vld [vmem:[%s7] sm:$0xff]
        %v486 = vld [vmem:[%s8] sm:$0xff]
        %488 = vset.pattern.permute.xlu0 0
        %489 = vperm.xlu0 %488, %v486
        %v490 = vpop.permute.xlu0 %489
        %vm492 = vcmask 64512
        %v494 = vsel %vm492, %v485, 0
        %496 = vmatprep.subr.mxu0 0.0
        %497 = vmatpush1.msra.mxu0 0.0
        %498 = vmatprep.subr.mxu0 0.0
        %499 = vmatpush1.msra.mxu0 0.0
        %500 = vmatprep.subr.mxu0 0.0
        %501 = vmatpush1.msra.mxu0 0.0
        %502 = vmatprep.subr.mxu0 0.0
        %503 = vmatpush1.msra.mxu0 0.0
        %504 = vmatprep.subr.mxu0 0.0
        %505 = vmatpush1.msra.mxu0 0.0
        %506 = vmatprep.subr.mxu0 0.0
        %507 = vmatpush1.msra.mxu0 0.0
        %508 = vmatprep.subr.mxu0 0.0
        %509 = vmatpush1.msra.mxu0 0.0
        %510 = vmatprep.subr.mxu0 0.0
        %511 = vmatpush1.msra.mxu0 0.0
        %512 = vmatprep.subr.mxu0 0.0
        %513 = vmatpush1.msra.mxu0 0.0
        %514 = vmatprep.subr.mxu0 0.0
        %515 = vmatpush1.msra.mxu0 0.0
        %516 = vmatprep.subr.mxu0 0.0
        %517 = vmatpush1.msra.mxu0 0.0
        %518 = vmatprep.subr.mxu0 0.0
        %519 = vmatpush1.msra.mxu0 0.0
        %520 = vmatprep.subr.mxu0 0.0
        %521 = vmatpush1.msra.mxu0 0.0
        %522 = vmatprep.subr.mxu0 0.0
        %523 = vmatpush1.msra.mxu0 0.0
        %524 = vmatprep.subr.mxu0 0.0
        %525 = vmatpush1.msra.mxu0 0.0
        %526 = vmatprep.subr.mxu0 %v480
        %527 = vmatpush1.msra.mxu0 %v479
        %528 = vmatprep.subr.mxu0 0.0
        %529 = vmatpush2.msra.mxu0 0.0
        %530 = vmatprep.subr.mxu0 0.0
        %531 = vmatpush2.msra.mxu0 0.0
        %532 = vmatprep.subr.mxu0 0.0
        %533 = vmatpush2.msra.mxu0 0.0
        %534 = vmatprep.subr.mxu0 0.0
        %535 = vmatpush2.msra.mxu0 0.0
        %536 = vmatprep.subr.mxu0 0.0
        %537 = vmatpush2.msra.mxu0 0.0
        %538 = vmatprep.subr.mxu0 0.0
        %539 = vmatpush2.msra.mxu0 0.0
        %540 = vmatprep.subr.mxu0 0.0
        %541 = vmatpush2.msra.mxu0 0.0
        %542 = vmatprep.subr.mxu0 0.0
        %543 = vmatpush2.msra.mxu0 0.0
        %544 = vmatprep.subr.mxu0 0.0
        %545 = vmatpush2.msra.mxu0 0.0
        %546 = vmatprep.subr.mxu0 0.0
        %547 = vmatpush2.msra.mxu0 0.0
        %548 = vmatprep.subr.mxu0 0.0
        %549 = vmatpush2.msra.mxu0 0.0
        %550 = vmatprep.subr.mxu0 0.0
        %551 = vmatpush2.msra.mxu0 0.0
        %552 = vmatprep.subr.mxu0 0.0
        %553 = vmatpush2.msra.mxu0 0.0
        %554 = vmatprep.subr.mxu0 0.0
        %555 = vmatpush2.msra.mxu0 0.0
        %556 = vmatprep.subr.mxu0 0.0
        %557 = vmatpush2.msra.mxu0 0.0
        %558 = vmatprep.subr.mxu0 0.0
        %559 = vmatpush2.msra.mxu0 0.0
        %560 = vmatprep.mubr.f32.mxu0 0.0
        %561 = vmatmul.mubr.f32.gmra.mxu0 %v494
        %v562 = vpop.f32.mrf.mxu0
        %v563 = vadd.f32 %v490, %v562
        %v564 = vpop.f32.mrf.mxu0
        %v565 = vadd.f32 %v490, %v564
        %566 = vdwg.mxu0
        %567 = vrot.lane.b32.xlu0 %v479, 34
        %v568 = vpop.permute.xlu0 %567
        %569 = vrot.lane.b32.xlu0 %v480, 34
        %v570 = vpop.permute.xlu0 %569
        %v571 = vlaneseq
        %v572 = vand.u32 %v571, 127
        %vm573 = vcmp.lt.s32.totalorder %v572, 34
        %v574 = vsel %vm573, %v568, %v570
        %v575 = vsel %vm573, %v570, %v568
        %vm576 = vcmp.ge.s32.totalorder %v477, 2
        %vm577 = vcmp.ge.s32.totalorder %v478, 2
        %vm578 = vmand %vm576, %vm577
        %v579 = vsel %vm578, 1, 0
        %v580 = vcvt.s32.f32 %v579
        %v582 = vlaneseq
        %v583 = vshrl.u32 %v582, 7
        %v584 = vsub.s32 0, %v583
        %v585 = vrot.slane %v580, %v584
        %v586 = vlaneseq
        %v587 = vshrl.u32 %v586, 7
        %v588 = vsub.s32 1, %v587
        %v589 = vrot.slane %v580, %v588
        %v592 = vmul.f32 %v575, %v585
        %v593 = vmul.f32 %v574, %v589
        %594 = vrot.lane.b32.xlu0 %v479, 33
        %v595 = vpop.permute.xlu0 %594
        %596 = vrot.lane.b32.xlu0 %v480, 33
        %v597 = vpop.permute.xlu0 %596
        %vm598 = vcmp.lt.s32.totalorder %v572, 33
        %v599 = vsel %vm598, %v595, %v597
        %v600 = vsel %vm598, %v597, %v595
        %vm601 = vcmp.ge.s32.totalorder %v478, 1
        %vm602 = vmand %vm576, %vm601
        %v603 = vsel %vm602, 1, 0
        %v604 = vcvt.s32.f32 %v603
        %v606 = vlaneseq
        %v607 = vshrl.u32 %v606, 7
        %v608 = vsub.s32 0, %v607
        %v609 = vrot.slane %v604, %v608
        %v610 = vlaneseq
        %v611 = vshrl.u32 %v610, 7
        %v612 = vsub.s32 1, %v611
        %v613 = vrot.slane %v604, %v612
        %v616 = vmul.f32 %v600, %v609
        %v617 = vmul.f32 %v599, %v613
        %618 = vrot.lane.b32.xlu0 %v479, 32
        %v619 = vpop.permute.xlu0 %618
        %620 = vrot.lane.b32.xlu0 %v480, 32
        %v621 = vpop.permute.xlu0 %620
        %vm622 = vcmp.lt.s32.totalorder %v572, 32
        %v623 = vsel %vm622, %v619, %v621
        %v624 = vsel %vm622, %v621, %v619
        %vm625 = vcmp.ge.s32.totalorder %v478, 0
        %vm626 = vmand %vm576, %vm625
        %v627 = vsel %vm626, 1, 0
        %v628 = vcvt.s32.f32 %v627
        %v630 = vlaneseq
        %v631 = vshrl.u32 %v630, 7
        %v632 = vsub.s32 0, %v631
        %v633 = vrot.slane %v628, %v632
        %v634 = vlaneseq
        %v635 = vshrl.u32 %v634, 7
        %v636 = vsub.s32 1, %v635
        %v637 = vrot.slane %v628, %v636
        %v640 = vmul.f32 %v624, %v633
        %v641 = vmul.f32 %v623, %v637
        %642 = vrot.lane.b32.xlu0 %v479, 18
        %v643 = vpop.permute.xlu0 %642
        %644 = vrot.lane.b32.xlu0 %v480, 18
        %v645 = vpop.permute.xlu0 %644
        %vm646 = vcmp.lt.s32.totalorder %v572, 18
        %v647 = vsel %vm646, %v643, %v645
        %v648 = vsel %vm646, %v645, %v643
        %vm649 = vcmp.ge.s32.totalorder %v477, 1
        %vm650 = vmand %vm649, %vm577
        %v651 = vsel %vm650, 1, 0
        %v652 = vcvt.s32.f32 %v651
        %v654 = vlaneseq
        %v655 = vshrl.u32 %v654, 7
        %v656 = vsub.s32 0, %v655
        %v657 = vrot.slane %v652, %v656
        %v658 = vlaneseq
        %v659 = vshrl.u32 %v658, 7
        %v660 = vsub.s32 1, %v659
        %v661 = vrot.slane %v652, %v660
        %v664 = vmul.f32 %v648, %v657
        %v665 = vmul.f32 %v647, %v661
        %666 = vrot.lane.b32.xlu0 %v479, 17
        %v667 = vpop.permute.xlu0 %666
        %668 = vrot.lane.b32.xlu0 %v480, 17
        %v669 = vpop.permute.xlu0 %668
        %vm670 = vcmp.lt.s32.totalorder %v572, 17
        %v671 = vsel %vm670, %v667, %v669
        %v672 = vsel %vm670, %v669, %v667
        %vm673 = vmand %vm649, %vm601
        %v674 = vsel %vm673, 1, 0
        %v675 = vcvt.s32.f32 %v674
        %v677 = vlaneseq
        %v678 = vshrl.u32 %v677, 7
        %v679 = vsub.s32 0, %v678
        %v680 = vrot.slane %v675, %v679
        %v681 = vlaneseq
        %v682 = vshrl.u32 %v681, 7
        %v683 = vsub.s32 1, %v682
        %v684 = vrot.slane %v675, %v683
        %v687 = vmul.f32 %v672, %v680
        %v688 = vmul.f32 %v671, %v684
        %689 = vrot.lane.b32.xlu0 %v479, 16
        %v690 = vpop.permute.xlu0 %689
        %691 = vrot.lane.b32.xlu0 %v480, 16
        %v692 = vpop.permute.xlu0 %691
        %vm693 = vcmp.lt.s32.totalorder %v572, 16
        %v694 = vsel %vm693, %v690, %v692
        %v695 = vsel %vm693, %v692, %v690
        %vm696 = vmand %vm649, %vm625
        %v697 = vsel %vm696, 1, 0
        %v698 = vcvt.s32.f32 %v697
        %v700 = vlaneseq
        %v701 = vshrl.u32 %v700, 7
        %v702 = vsub.s32 0, %v701
        %v703 = vrot.slane %v698, %v702
        %v704 = vlaneseq
        %v705 = vshrl.u32 %v704, 7
        %v706 = vsub.s32 1, %v705
        %v707 = vrot.slane %v698, %v706
        %v710 = vmul.f32 %v695, %v703
        %v711 = vmul.f32 %v694, %v707
        %712 = vrot.lane.b32.xlu0 %v479, 2
        %v713 = vpop.permute.xlu0 %712
        %714 = vrot.lane.b32.xlu0 %v480, 2
        %v715 = vpop.permute.xlu0 %714
        %vm716 = vcmp.lt.s32.totalorder %v572, 2
        %v717 = vsel %vm716, %v713, %v715
        %v718 = vsel %vm716, %v715, %v713
        %vm719 = vcmp.ge.s32.totalorder %v477, 0
        %vm720 = vmand %vm719, %vm577
        %v721 = vsel %vm720, 1, 0
        %v722 = vcvt.s32.f32 %v721
        %v724 = vlaneseq
        %v725 = vshrl.u32 %v724, 7
        %v726 = vsub.s32 0, %v725
        %v727 = vrot.slane %v722, %v726
        %v728 = vlaneseq
        %v729 = vshrl.u32 %v728, 7
        %v730 = vsub.s32 1, %v729
        %v731 = vrot.slane %v722, %v730
        %v734 = vmul.f32 %v718, %v727
        %v735 = vmul.f32 %v717, %v731
        %736 = vrot.lane.b32.xlu0 %v479, 1
        %v737 = vpop.permute.xlu0 %736
        %738 = vrot.lane.b32.xlu0 %v480, 1
        %v739 = vpop.permute.xlu0 %738
        %vm740 = vcmp.lt.s32.totalorder %v572, 1
        %v741 = vsel %vm740, %v737, %v739
        %v742 = vsel %vm740, %v739, %v737
        %vm743 = vmand %vm719, %vm601
        %v744 = vsel %vm743, 1, 0
        %v745 = vcvt.s32.f32 %v744
        %v747 = vlaneseq
        %v748 = vshrl.u32 %v747, 7
        %v749 = vsub.s32 0, %v748
        %v750 = vrot.slane %v745, %v749
        %v751 = vlaneseq
        %v752 = vshrl.u32 %v751, 7
        %v753 = vsub.s32 1, %v752
        %v754 = vrot.slane %v745, %v753
        %v757 = vmul.f32 %v742, %v750
        %v758 = vmul.f32 %v741, %v754
        %760 = vset.pattern.permute.xlu0 0
        %761 = vperm.xlu0 %760, %v482
        %v762 = vpop.permute.xlu0 %761
        %vm764 = vcmask 588800
        %v766 = vsel %vm764, %v481, 0
        %768 = vmatprep.subr.mxu0 0.0
        %769 = vmatpush1.msra.mxu0 0.0
        %770 = vmatprep.subr.mxu0 0.0
        %771 = vmatpush1.msra.mxu0 0.0
        %772 = vmatprep.subr.mxu0 0.0
        %773 = vmatpush1.msra.mxu0 0.0
        %774 = vmatprep.subr.mxu0 0.0
        %775 = vmatpush1.msra.mxu0 0.0
        %776 = vmatprep.subr.mxu0 0.0
        %777 = vmatpush1.msra.mxu0 0.0
        %778 = vmatprep.subr.mxu0 0.0
        %779 = vmatpush1.msra.mxu0 0.0
        %780 = vmatprep.subr.mxu0 0.0
        %781 = vmatpush1.msra.mxu0 0.0
        %782 = vmatprep.subr.mxu0 %v480
        %783 = vmatpush1.msra.mxu0 %v479
        %784 = vmatprep.subr.mxu0 %v758
        %785 = vmatpush1.msra.mxu0 %v757
        %786 = vmatprep.subr.mxu0 %v735
        %787 = vmatpush1.msra.mxu0 %v734
        %788 = vmatprep.subr.mxu0 %v711
        %789 = vmatpush1.msra.mxu0 %v710
        %790 = vmatprep.subr.mxu0 %v688
        %791 = vmatpush1.msra.mxu0 %v687
        %792 = vmatprep.subr.mxu0 %v665
        %793 = vmatpush1.msra.mxu0 %v664
        %794 = vmatprep.subr.mxu0 %v641
        %795 = vmatpush1.msra.mxu0 %v640
        %796 = vmatprep.subr.mxu0 %v617
        %797 = vmatpush1.msra.mxu0 %v616
        %798 = vmatprep.subr.mxu0 %v593
        %799 = vmatpush1.msra.mxu0 %v592
        %800 = vmatprep.subr.mxu0 0.0
        %801 = vmatpush2.msra.mxu0 0.0
        %802 = vmatprep.subr.mxu0 0.0
        %803 = vmatpush2.msra.mxu0 0.0
        %804 = vmatprep.subr.mxu0 0.0
        %805 = vmatpush2.msra.mxu0 0.0
        %806 = vmatprep.subr.mxu0 0.0
        %807 = vmatpush2.msra.mxu0 0.0
        %808 = vmatprep.subr.mxu0 0.0
        %809 = vmatpush2.msra.mxu0 0.0
        %810 = vmatprep.subr.mxu0 0.0
        %811 = vmatpush2.msra.mxu0 0.0
        %812 = vmatprep.subr.mxu0 0.0
        %813 = vmatpush2.msra.mxu0 0.0
        %814 = vmatprep.subr.mxu0 0.0
        %815 = vmatpush2.msra.mxu0 0.0
        %816 = vmatprep.subr.mxu0 0.0
        %817 = vmatpush2.msra.mxu0 0.0
        %818 = vmatprep.subr.mxu0 0.0
        %819 = vmatpush2.msra.mxu0 0.0
        %820 = vmatprep.subr.mxu0 0.0
        %821 = vmatpush2.msra.mxu0 0.0
        %822 = vmatprep.subr.mxu0 0.0
        %823 = vmatpush2.msra.mxu0 0.0
        %824 = vmatprep.subr.mxu0 0.0
        %825 = vmatpush2.msra.mxu0 0.0
        %826 = vmatprep.subr.mxu0 0.0
        %827 = vmatpush2.msra.mxu0 0.0
        %828 = vmatprep.subr.mxu0 0.0
        %829 = vmatpush2.msra.mxu0 0.0
        %830 = vmatprep.subr.mxu0 0.0
        %831 = vmatpush2.msra.mxu0 0.0
        %832 = vmatprep.mubr.f32.mxu0 0.0
        %833 = vmatmul.mubr.f32.gmra.mxu0 %v766
        %v834 = vpop.f32.mrf.mxu0
        %v835 = vadd.f32 %v762, %v834
        %v836 = vpop.f32.mrf.mxu0
        %v837 = vadd.f32 %v762, %v836
        %838 = vdwg.mxu0
        %v839 = vmax.f32 %v835, 0.0
        %v840 = vmax.f32 %v837, 0.0
        %841 = vrot.lane.b32.xlu0 %v839, 34
        %v842 = vpop.permute.xlu0 %841
        %843 = vrot.lane.b32.xlu0 %v840, 34
        %v844 = vpop.permute.xlu0 %843
        %v845 = vsel %vm573, %v842, %v844
        %v846 = vsel %vm573, %v844, %v842
        %v847 = vmul.f32 %v846, %v585
        %v848 = vmul.f32 %v845, %v589
        %849 = vrot.lane.b32.xlu0 %v839, 33
        %v850 = vpop.permute.xlu0 %849
        %851 = vrot.lane.b32.xlu0 %v840, 33
        %v852 = vpop.permute.xlu0 %851
        %v853 = vsel %vm598, %v850, %v852
        %v854 = vsel %vm598, %v852, %v850
        %v855 = vmul.f32 %v854, %v609
        %v856 = vmul.f32 %v853, %v613
        %857 = vrot.lane.b32.xlu0 %v839, 32
        %v858 = vpop.permute.xlu0 %857
        %859 = vrot.lane.b32.xlu0 %v840, 32
        %v860 = vpop.permute.xlu0 %859
        %v861 = vsel %vm622, %v858, %v860
        %v862 = vsel %vm622, %v860, %v858
        %v863 = vmul.f32 %v862, %v633
        %v864 = vmul.f32 %v861, %v637
        %865 = vrot.lane.b32.xlu0 %v839, 18
        %v866 = vpop.permute.xlu0 %865
        %867 = vrot.lane.b32.xlu0 %v840, 18
        %v868 = vpop.permute.xlu0 %867
        %v869 = vsel %vm646, %v866, %v868
        %v870 = vsel %vm646, %v868, %v866
        %v871 = vmul.f32 %v870, %v657
        %v872 = vmul.f32 %v869, %v661
        %873 = vrot.lane.b32.xlu0 %v839, 17
        %v874 = vpop.permute.xlu0 %873
        %875 = vrot.lane.b32.xlu0 %v840, 17
        %v876 = vpop.permute.xlu0 %875
        %v877 = vsel %vm670, %v874, %v876
        %v878 = vsel %vm670, %v876, %v874
        %v879 = vmul.f32 %v878, %v680
        %v880 = vmul.f32 %v877, %v684
        %881 = vrot.lane.b32.xlu0 %v839, 16
        %v882 = vpop.permute.xlu0 %881
        %883 = vrot.lane.b32.xlu0 %v840, 16
        %v884 = vpop.permute.xlu0 %883
        %v885 = vsel %vm693, %v882, %v884
        %v886 = vsel %vm693, %v884, %v882
        %v887 = vmul.f32 %v886, %v703
        %v888 = vmul.f32 %v885, %v707
        %889 = vrot.lane.b32.xlu0 %v839, 2
        %v890 = vpop.permute.xlu0 %889
        %891 = vrot.lane.b32.xlu0 %v840, 2
        %v892 = vpop.permute.xlu0 %891
        %v893 = vsel %vm716, %v890, %v892
        %v894 = vsel %vm716, %v892, %v890
        %v895 = vmul.f32 %v894, %v727
        %v896 = vmul.f32 %v893, %v731
        %897 = vrot.lane.b32.xlu0 %v839, 1
        %v898 = vpop.permute.xlu0 %897
        %899 = vrot.lane.b32.xlu0 %v840, 1
        %v900 = vpop.permute.xlu0 %899
        %v901 = vsel %vm740, %v898, %v900
        %v902 = vsel %vm740, %v900, %v898
        %v903 = vmul.f32 %v902, %v750
        %v904 = vmul.f32 %v901, %v754
        %906 = vset.pattern.permute.xlu0 0
        %907 = vperm.xlu0 %906, %v484
        %v908 = vpop.permute.xlu0 %907
        %v911 = vsel %vm764, %v483, 0
        %913 = vmatprep.subr.mxu0 0.0
        %914 = vmatpush1.msra.mxu0 0.0
        %915 = vmatprep.subr.mxu0 0.0
        %916 = vmatpush1.msra.mxu0 0.0
        %917 = vmatprep.subr.mxu0 0.0
        %918 = vmatpush1.msra.mxu0 0.0
        %919 = vmatprep.subr.mxu0 0.0
        %920 = vmatpush1.msra.mxu0 0.0
        %921 = vmatprep.subr.mxu0 0.0
        %922 = vmatpush1.msra.mxu0 0.0
        %923 = vmatprep.subr.mxu0 0.0
        %924 = vmatpush1.msra.mxu0 0.0
        %925 = vmatprep.subr.mxu0 0.0
        %926 = vmatpush1.msra.mxu0 0.0
        %927 = vmatprep.subr.mxu0 %v840
        %928 = vmatpush1.msra.mxu0 %v839
        %929 = vmatprep.subr.mxu0 %v904
        %930 = vmatpush1.msra.mxu0 %v903
        %931 = vmatprep.subr.mxu0 %v896
        %932 = vmatpush1.msra.mxu0 %v895
        %933 = vmatprep.subr.mxu0 %v888
        %934 = vmatpush1.msra.mxu0 %v887
        %935 = vmatprep.subr.mxu0 %v880
        %936 = vmatpush1.msra.mxu0 %v879
        %937 = vmatprep.subr.mxu0 %v872
        %938 = vmatpush1.msra.mxu0 %v871
        %939 = vmatprep.subr.mxu0 %v864
        %940 = vmatpush1.msra.mxu0 %v863
        %941 = vmatprep.subr.mxu0 %v856
        %942 = vmatpush1.msra.mxu0 %v855
        %943 = vmatprep.subr.mxu0 %v848
        %944 = vmatpush1.msra.mxu0 %v847
        %945 = vmatprep.subr.mxu0 0.0
        %946 = vmatpush2.msra.mxu0 0.0
        %947 = vmatprep.subr.mxu0 0.0
        %948 = vmatpush2.msra.mxu0 0.0
        %949 = vmatprep.subr.mxu0 0.0
        %950 = vmatpush2.msra.mxu0 0.0
        %951 = vmatprep.subr.mxu0 0.0
        %952 = vmatpush2.msra.mxu0 0.0
        %953 = vmatprep.subr.mxu0 0.0
        %954 = vmatpush2.msra.mxu0 0.0
        %955 = vmatprep.subr.mxu0 0.0
        %956 = vmatpush2.msra.mxu0 0.0
        %957 = vmatprep.subr.mxu0 0.0
        %958 = vmatpush2.msra.mxu0 0.0
        %959 = vmatprep.subr.mxu0 0.0
        %960 = vmatpush2.msra.mxu0 0.0
        %961 = vmatprep.subr.mxu0 0.0
        %962 = vmatpush2.msra.mxu0 0.0
        %963 = vmatprep.subr.mxu0 0.0
        %964 = vmatpush2.msra.mxu0 0.0
        %965 = vmatprep.subr.mxu0 0.0
        %966 = vmatpush2.msra.mxu0 0.0
        %967 = vmatprep.subr.mxu0 0.0
        %968 = vmatpush2.msra.mxu0 0.0
        %969 = vmatprep.subr.mxu0 0.0
        %970 = vmatpush2.msra.mxu0 0.0
        %971 = vmatprep.subr.mxu0 0.0
        %972 = vmatpush2.msra.mxu0 0.0
        %973 = vmatprep.subr.mxu0 0.0
        %974 = vmatpush2.msra.mxu0 0.0
        %975 = vmatprep.subr.mxu0 0.0
        %976 = vmatpush2.msra.mxu0 0.0
        %977 = vmatprep.mubr.f32.mxu0 0.0
        %978 = vmatmul.mubr.f32.gmra.mxu0 %v911
        %v979 = vpop.f32.mrf.mxu0
        %v980 = vadd.f32 %v908, %v979
        %v981 = vpop.f32.mrf.mxu0
        %v982 = vadd.f32 %v908, %v981
        %983 = vdwg.mxu0
        %v984 = vmax.f32 %v980, 0.0
        %v985 = vmax.f32 %v982, 0.0
        %v986 = vadd.f32 %v984, %v563
        %v987 = vadd.f32 %v985, %v565
        %v988 = vmax.f32 %v986, 0.0
        %v989 = vmax.f32 %v987, 0.0
        %v990 = vld [vmem:[#allocation7] sm:$0xff]
        %v991 = vld [vmem:[%s10] sm:$0xff]
        %v992 = vld [vmem:[%s11] sm:$0xff]
        %v993 = vld [vmem:[%s12] sm:$0xff]
        %994 = vrot.lane.b32.xlu0 %v988, 68
        %v995 = vpop.permute.xlu0 %994
        %996 = vrot.lane.b32.xlu0 %v989, 68
        %v997 = vpop.permute.xlu0 %996
        %vm998 = vcmp.lt.s32.totalorder %v572, 68
        %v999 = vsel %vm998, %v995, %v997
        %v1000 = vsel %vm998, %v997, %v995
        %vm1001 = vcmp.ge.s32.totalorder %v477, 4
        %vm1002 = vcmp.ge.s32.totalorder %v478, 4
        %vm1003 = vmand %vm1001, %vm1002
        %v1004 = vsel %vm1003, 1, 0
        %v1005 = vcvt.s32.f32 %v1004
        %v1007 = vlaneseq
        %v1008 = vshrl.u32 %v1007, 7
        %v1009 = vsub.s32 0, %v1008
        %v1010 = vrot.slane %v1005, %v1009
        %v1011 = vlaneseq
        %v1012 = vshrl.u32 %v1011, 7
        %v1013 = vsub.s32 1, %v1012
        %v1014 = vrot.slane %v1005, %v1013
        %v1017 = vmul.f32 %v1000, %v1010
        %v1018 = vmul.f32 %v999, %v1014
        %1019 = vrot.lane.b32.xlu0 %v988, 66
        %v1020 = vpop.permute.xlu0 %1019
        %1021 = vrot.lane.b32.xlu0 %v989, 66
        %v1022 = vpop.permute.xlu0 %1021
        %vm1023 = vcmp.lt.s32.totalorder %v572, 66
        %v1024 = vsel %vm1023, %v1020, %v1022
        %v1025 = vsel %vm1023, %v1022, %v1020
        %vm1026 = vmand %vm1001, %vm577
        %v1027 = vsel %vm1026, 1, 0
        %v1028 = vcvt.s32.f32 %v1027
        %v1030 = vlaneseq
        %v1031 = vshrl.u32 %v1030, 7
        %v1032 = vsub.s32 0, %v1031
        %v1033 = vrot.slane %v1028, %v1032
        %v1034 = vlaneseq
        %v1035 = vshrl.u32 %v1034, 7
        %v1036 = vsub.s32 1, %v1035
        %v1037 = vrot.slane %v1028, %v1036
        %v1040 = vmul.f32 %v1025, %v1033
        %v1041 = vmul.f32 %v1024, %v1037
        %1042 = vrot.lane.b32.xlu0 %v988, 64
        %v1043 = vpop.permute.xlu0 %1042
        %1044 = vrot.lane.b32.xlu0 %v989, 64
        %v1045 = vpop.permute.xlu0 %1044
        %vm1046 = vcmp.lt.s32.totalorder %v572, 64
        %v1047 = vsel %vm1046, %v1043, %v1045
        %v1048 = vsel %vm1046, %v1045, %v1043
        %vm1049 = vmand %vm1001, %vm625
        %v1050 = vsel %vm1049, 1, 0
        %v1051 = vcvt.s32.f32 %v1050
        %v1053 = vlaneseq
        %v1054 = vshrl.u32 %v1053, 7
        %v1055 = vsub.s32 0, %v1054
        %v1056 = vrot.slane %v1051, %v1055
        %v1057 = vlaneseq
        %v1058 = vshrl.u32 %v1057, 7
        %v1059 = vsub.s32 1, %v1058
        %v1060 = vrot.slane %v1051, %v1059
        %v1063 = vmul.f32 %v1048, %v1056
        %v1064 = vmul.f32 %v1047, %v1060
        %1065 = vrot.lane.b32.xlu0 %v988, 36
        %v1066 = vpop.permute.xlu0 %1065
        %1067 = vrot.lane.b32.xlu0 %v989, 36
        %v1068 = vpop.permute.xlu0 %1067
        %vm1069 = vcmp.lt.s32.totalorder %v572, 36
        %v1070 = vsel %vm1069, %v1066, %v1068
        %v1071 = vsel %vm1069, %v1068, %v1066
        %vm1072 = vmand %vm576, %vm1002
        %v1073 = vsel %vm1072, 1, 0
        %v1074 = vcvt.s32.f32 %v1073
        %v1076 = vlaneseq
        %v1077 = vshrl.u32 %v1076, 7
        %v1078 = vsub.s32 0, %v1077
        %v1079 = vrot.slane %v1074, %v1078
        %v1080 = vlaneseq
        %v1081 = vshrl.u32 %v1080, 7
        %v1082 = vsub.s32 1, %v1081
        %v1083 = vrot.slane %v1074, %v1082
        %v1086 = vmul.f32 %v1071, %v1079
        %v1087 = vmul.f32 %v1070, %v1083
        %1088 = vrot.lane.b32.xlu0 %v988, 34
        %v1089 = vpop.permute.xlu0 %1088
        %1090 = vrot.lane.b32.xlu0 %v989, 34
        %v1091 = vpop.permute.xlu0 %1090
        %v1092 = vsel %vm573, %v1089, %v1091
        %v1093 = vsel %vm573, %v1091, %v1089
        %v1094 = vmul.f32 %v1093, %v585
        %v1095 = vmul.f32 %v1092, %v589
        %1096 = vrot.lane.b32.xlu0 %v988, 32
        %v1097 = vpop.permute.xlu0 %1096
        %1098 = vrot.lane.b32.xlu0 %v989, 32
        %v1099 = vpop.permute.xlu0 %1098
        %v1100 = vsel %vm622, %v1097, %v1099
        %v1101 = vsel %vm622, %v1099, %v1097
        %v1102 = vmul.f32 %v1101, %v633
        %v1103 = vmul.f32 %v1100, %v637
        %1104 = vrot.lane.b32.xlu0 %v988, 4
        %v1105 = vpop.permute.xlu0 %1104
        %1106 = vrot.lane.b32.xlu0 %v989, 4
        %v1107 = vpop.permute.xlu0 %1106
        %vm1108 = vcmp.lt.s32.totalorder %v572, 4
        %v1109 = vsel %vm1108, %v1105, %v1107
        %v1110 = vsel %vm1108, %v1107, %v1105
        %vm1111 = vmand %vm719, %vm1002
        %v1112 = vsel %vm1111, 1, 0
        %v1113 = vcvt.s32.f32 %v1112
        %v1115 = vlaneseq
        %v1116 = vshrl.u32 %v1115, 7
        %v1117 = vsub.s32 0, %v1116
        %v1118 = vrot.slane %v1113, %v1117
        %v1119 = vlaneseq
        %v1120 = vshrl.u32 %v1119, 7
        %v1121 = vsub.s32 1, %v1120
        %v1122 = vrot.slane %v1113, %v1121
        %v1125 = vmul.f32 %v1110, %v1118
        %v1126 = vmul.f32 %v1109, %v1122
        %1127 = vrot.lane.b32.xlu0 %v988, 2
        %v1128 = vpop.permute.xlu0 %1127
        %1129 = vrot.lane.b32.xlu0 %v989, 2
        %v1130 = vpop.permute.xlu0 %1129
        %v1131 = vsel %vm716, %v1128, %v1130
        %v1132 = vsel %vm716, %v1130, %v1128
        %v1133 = vmul.f32 %v1132, %v727
        %v1134 = vmul.f32 %v1131, %v731
        %1136 = vset.pattern.permute.xlu0 0
        %1137 = vperm.xlu0 %1136, %v991
        %v1138 = vpop.permute.xlu0 %1137
        %v1141 = vsel %vm764, %v990, 0
        %1143 = vmatprep.subr.mxu0 0.0
        %1144 = vmatpush1.msra.mxu0 0.0
        %1145 = vmatprep.subr.mxu0 0.0
        %1146 = vmatpush1.msra.mxu0 0.0
        %1147 = vmatprep.subr.mxu0 0.0
        %1148 = vmatpush1.msra.mxu0 0.0
        %1149 = vmatprep.subr.mxu0 0.0
        %1150 = vmatpush1.msra.mxu0 0.0
        %1151 = vmatprep.subr.mxu0 0.0
        %1152 = vmatpush1.msra.mxu0 0.0
        %1153 = vmatprep.subr.mxu0 0.0
        %1154 = vmatpush1.msra.mxu0 0.0
        %1155 = vmatprep.subr.mxu0 0.0
        %1156 = vmatpush1.msra.mxu0 0.0
        %1157 = vmatprep.subr.mxu0 %v989
        %1158 = vmatpush1.msra.mxu0 %v988
        %1159 = vmatprep.subr.mxu0 %v1134
        %1160 = vmatpush1.msra.mxu0 %v1133
        %1161 = vmatprep.subr.mxu0 %v1126
        %1162 = vmatpush1.msra.mxu0 %v1125
        %1163 = vmatprep.subr.mxu0 %v1103
        %1164 = vmatpush1.msra.mxu0 %v1102
        %1165 = vmatprep.subr.mxu0 %v1095
        %1166 = vmatpush1.msra.mxu0 %v1094
        %1167 = vmatprep.subr.mxu0 %v1087
        %1168 = vmatpush1.msra.mxu0 %v1086
        %1169 = vmatprep.subr.mxu0 %v1064
        %1170 = vmatpush1.msra.mxu0 %v1063
        %1171 = vmatprep.subr.mxu0 %v1041
        %1172 = vmatpush1.msra.mxu0 %v1040
        %1173 = vmatprep.subr.mxu0 %v1018
        %1174 = vmatpush1.msra.mxu0 %v1017
        %1175 = vmatprep.subr.mxu0 0.0
        %1176 = vmatpush2.msra.mxu0 0.0
        %1177 = vmatprep.subr.mxu0 0.0
        %1178 = vmatpush2.msra.mxu0 0.0
        %1179 = vmatprep.subr.mxu0 0.0
        %1180 = vmatpush2.msra.mxu0 0.0
        %1181 = vmatprep.subr.mxu0 0.0
        %1182 = vmatpush2.msra.mxu0 0.0
        %1183 = vmatprep.subr.mxu0 0.0
        %1184 = vmatpush2.msra.mxu0 0.0
        %1185 = vmatprep.subr.mxu0 0.0
        %1186 = vmatpush2.msra.mxu0 0.0
        %1187 = vmatprep.subr.mxu0 0.0
        %1188 = vmatpush2.msra.mxu0 0.0
        %1189 = vmatprep.subr.mxu0 0.0
        %1190 = vmatpush2.msra.mxu0 0.0
        %1191 = vmatprep.subr.mxu0 0.0
        %1192 = vmatpush2.msra.mxu0 0.0
        %1193 = vmatprep.subr.mxu0 0.0
        %1194 = vmatpush2.msra.mxu0 0.0
        %1195 = vmatprep.subr.mxu0 0.0
        %1196 = vmatpush2.msra.mxu0 0.0
        %1197 = vmatprep.subr.mxu0 0.0
        %1198 = vmatpush2.msra.mxu0 0.0
        %1199 = vmatprep.subr.mxu0 0.0
        %1200 = vmatpush2.msra.mxu0 0.0
        %1201 = vmatprep.subr.mxu0 0.0
        %1202 = vmatpush2.msra.mxu0 0.0
        %1203 = vmatprep.subr.mxu0 0.0
        %1204 = vmatpush2.msra.mxu0 0.0
        %1205 = vmatprep.subr.mxu0 0.0
        %1206 = vmatpush2.msra.mxu0 0.0
        %1207 = vmatprep.mubr.f32.mxu0 0.0
        %1208 = vmatmul.mubr.f32.gmra.mxu0 %v1141
        %v1209 = vpop.f32.mrf.mxu0
        %v1210 = vadd.f32 %v1138, %v1209
        %v1211 = vpop.f32.mrf.mxu0
        %v1212 = vadd.f32 %v1138, %v1211
        %1213 = vdwg.mxu0
        %v1214 = vmax.f32 %v1210, 0.0
        %v1215 = vmax.f32 %v1212, 0.0
        %1216 = vrot.lane.b32.xlu0 %v1214, 68
        %v1217 = vpop.permute.xlu0 %1216
        %1218 = vrot.lane.b32.xlu0 %v1215, 68
        %v1219 = vpop.permute.xlu0 %1218
        %v1220 = vsel %vm998, %v1217, %v1219
        %v1221 = vsel %vm998, %v1219, %v1217
        %v1222 = vmul.f32 %v1221, %v1010
        %v1223 = vmul.f32 %v1220, %v1014
        %1224 = vrot.lane.b32.xlu0 %v1214, 66
        %v1225 = vpop.permute.xlu0 %1224
        %1226 = vrot.lane.b32.xlu0 %v1215, 66
        %v1227 = vpop.permute.xlu0 %1226
        %v1228 = vsel %vm1023, %v1225, %v1227
        %v1229 = vsel %vm1023, %v1227, %v1225
        %v1230 = vmul.f32 %v1229, %v1033
        %v1231 = vmul.f32 %v1228, %v1037
        %1232 = vrot.lane.b32.xlu0 %v1214, 64
        %v1233 = vpop.permute.xlu0 %1232
        %1234 = vrot.lane.b32.xlu0 %v1215, 64
        %v1235 = vpop.permute.xlu0 %1234
        %v1236 = vsel %vm1046, %v1233, %v1235
        %v1237 = vsel %vm1046, %v1235, %v1233
        %v1238 = vmul.f32 %v1237, %v1056
        %v1239 = vmul.f32 %v1236, %v1060
        %1240 = vrot.lane.b32.xlu0 %v1214, 36
        %v1241 = vpop.permute.xlu0 %1240
        %1242 = vrot.lane.b32.xlu0 %v1215, 36
        %v1243 = vpop.permute.xlu0 %1242
        %v1244 = vsel %vm1069, %v1241, %v1243
        %v1245 = vsel %vm1069, %v1243, %v1241
        %v1246 = vmul.f32 %v1245, %v1079
        %v1247 = vmul.f32 %v1244, %v1083
        %1248 = vrot.lane.b32.xlu0 %v1214, 34
        %v1249 = vpop.permute.xlu0 %1248
        %1250 = vrot.lane.b32.xlu0 %v1215, 34
        %v1251 = vpop.permute.xlu0 %1250
        %v1252 = vsel %vm573, %v1249, %v1251
        %v1253 = vsel %vm573, %v1251, %v1249
        %v1254 = vmul.f32 %v1253, %v585
        %v1255 = vmul.f32 %v1252, %v589
        %1256 = vrot.lane.b32.xlu0 %v1214, 32
        %v1257 = vpop.permute.xlu0 %1256
        %1258 = vrot.lane.b32.xlu0 %v1215, 32
        %v1259 = vpop.permute.xlu0 %1258
        %v1260 = vsel %vm622, %v1257, %v1259
        %v1261 = vsel %vm622, %v1259, %v1257
        %v1262 = vmul.f32 %v1261, %v633
        %v1263 = vmul.f32 %v1260, %v637
        %1264 = vrot.lane.b32.xlu0 %v1214, 4
        %v1265 = vpop.permute.xlu0 %1264
        %1266 = vrot.lane.b32.xlu0 %v1215, 4
        %v1267 = vpop.permute.xlu0 %1266
        %v1268 = vsel %vm1108, %v1265, %v1267
        %v1269 = vsel %vm1108, %v1267, %v1265
        %v1270 = vmul.f32 %v1269, %v1118
        %v1271 = vmul.f32 %v1268, %v1122
        %1272 = vrot.lane.b32.xlu0 %v1214, 2
        %v1273 = vpop.permute.xlu0 %1272
        %1274 = vrot.lane.b32.xlu0 %v1215, 2
        %v1275 = vpop.permute.xlu0 %1274
        %v1276 = vsel %vm716, %v1273, %v1275
        %v1277 = vsel %vm716, %v1275, %v1273
        %v1278 = vmul.f32 %v1277, %v727
        %v1279 = vmul.f32 %v1276, %v731
        %1281 = vset.pattern.permute.xlu0 0
        %1282 = vperm.xlu0 %1281, %v993
        %v1283 = vpop.permute.xlu0 %1282
        %v1286 = vsel %vm764, %v992, 0
        %1288 = vmatprep.subr.mxu0 0.0
        %1289 = vmatpush1.msra.mxu0 0.0
        %1290 = vmatprep.subr.mxu0 0.0
        %1291 = vmatpush1.msra.mxu0 0.0
        %1292 = vmatprep.subr.mxu0 0.0
        %1293 = vmatpush1.msra.mxu0 0.0
        %1294 = vmatprep.subr.mxu0 0.0
        %1295 = vmatpush1.msra.mxu0 0.0
        %1296 = vmatprep.subr.mxu0 0.0
        %1297 = vmatpush1.msra.mxu0 0.0
        %1298 = vmatprep.subr.mxu0 0.0
        %1299 = vmatpush1.msra.mxu0 0.0
        %1300 = vmatprep.subr.mxu0 0.0
        %1301 = vmatpush1.msra.mxu0 0.0
        %1302 = vmatprep.subr.mxu0 %v1215
        %1303 = vmatpush1.msra.mxu0 %v1214
        %1304 = vmatprep.subr.mxu0 %v1279
        %1305 = vmatpush1.msra.mxu0 %v1278
        %1306 = vmatprep.subr.mxu0 %v1271
        %1307 = vmatpush1.msra.mxu0 %v1270
        %1308 = vmatprep.subr.mxu0 %v1263
        %1309 = vmatpush1.msra.mxu0 %v1262
        %1310 = vmatprep.subr.mxu0 %v1255
        %1311 = vmatpush1.msra.mxu0 %v1254
        %1312 = vmatprep.subr.mxu0 %v1247
        %1313 = vmatpush1.msra.mxu0 %v1246
        %1314 = vmatprep.subr.mxu0 %v1239
        %1315 = vmatpush1.msra.mxu0 %v1238
        %1316 = vmatprep.subr.mxu0 %v1231
        %1317 = vmatpush1.msra.mxu0 %v1230
        %1318 = vmatprep.subr.mxu0 %v1223
        %1319 = vmatpush1.msra.mxu0 %v1222
        %1320 = vmatprep.subr.mxu0 0.0
        %1321 = vmatpush2.msra.mxu0 0.0
        %1322 = vmatprep.subr.mxu0 0.0
        %1323 = vmatpush2.msra.mxu0 0.0
        %1324 = vmatprep.subr.mxu0 0.0
        %1325 = vmatpush2.msra.mxu0 0.0
        %1326 = vmatprep.subr.mxu0 0.0
        %1327 = vmatpush2.msra.mxu0 0.0
        %1328 = vmatprep.subr.mxu0 0.0
        %1329 = vmatpush2.msra.mxu0 0.0
        %1330 = vmatprep.subr.mxu0 0.0
        %1331 = vmatpush2.msra.mxu0 0.0
        %1332 = vmatprep.subr.mxu0 0.0
        %1333 = vmatpush2.msra.mxu0 0.0
        %1334 = vmatprep.subr.mxu0 0.0
        %1335 = vmatpush2.msra.mxu0 0.0
        %1336 = vmatprep.subr.mxu0 0.0
        %1337 = vmatpush2.msra.mxu0 0.0
        %1338 = vmatprep.subr.mxu0 0.0
        %1339 = vmatpush2.msra.mxu0 0.0
        %1340 = vmatprep.subr.mxu0 0.0
        %1341 = vmatpush2.msra.mxu0 0.0
        %1342 = vmatprep.subr.mxu0 0.0
        %1343 = vmatpush2.msra.mxu0 0.0
        %1344 = vmatprep.subr.mxu0 0.0
        %1345 = vmatpush2.msra.mxu0 0.0
        %1346 = vmatprep.subr.mxu0 0.0
        %1347 = vmatpush2.msra.mxu0 0.0
        %1348 = vmatprep.subr.mxu0 0.0
        %1349 = vmatpush2.msra.mxu0 0.0
        %1350 = vmatprep.subr.mxu0 0.0
        %1351 = vmatpush2.msra.mxu0 0.0
        %1352 = vmatprep.mubr.f32.mxu0 0.0
        %1353 = vmatmul.mubr.f32.gmra.mxu0 %v1286
        %v1354 = vpop.f32.mrf.mxu0
        %v1355 = vadd.f32 %v1283, %v1354
        %v1356 = vpop.f32.mrf.mxu0
        %v1357 = vadd.f32 %v1283, %v1356
        %1358 = vdwg.mxu0
        %v1359 = vmax.f32 %v1355, 0.0
        %v1360 = vmax.f32 %v1357, 0.0
        %v1361 = vadd.f32 %v1359, %v988
        %v1362 = vadd.f32 %v1360, %v989
        %v1363 = vmax.f32 %v1361, 0.0
        %v1364 = vmax.f32 %v1362, 0.0
        %1365 = vst [vmem:[%s471] sm:$0xff] %v1363
        %1366 = vst [vmem:[%s471 + $0x8] sm:$0xff] %v1364
        %s1367 = sand.u32 %s315, 1
        %s1368 = scalar_lea.sflag [#allocation4], %s1367
        %s1369 = sand.u32 %s315, 1
        %s1370 = smul.addr %s1369, 16
        %s1371 = scalar_lea.vmem [#allocation8], %s1370
        // Predicated region
        $region85: #{tpu_custom_call.1} parent=71 // pred_check
          %p1372 = pneg %p325
        $region86: #{tpu_custom_call.1} parent=71 // pred_check_branch
          %1374 = sbr.rel (%p1372) target = $region88
        $region87: #{tpu_custom_call.1} parent=71 // pred_region
          %s1376 = ssub.s32 256, 256
          %1377 = vsyncadd %s1368, %s1376
          %s1378 = smul.addr %s29, 2
          %s1379 = smul.addr %s1378, 128
          %s1380 = scalar_lea.hbm %s13, %s1379
          %s1382 = sshll.u32 %s1371, 4
          %s1383 = int_to_ptr.vmem [resolvable:$true] %s1382
          %1385 = dma.vmem_to_hbm [thread:$0]  %s1383, 256, %s1380, %s1368
        $region88: #{tpu_custom_call.1} parent=71 // pred_fallthru
          _
      $region72: #{tpu_custom_call.1} parent=5 // pred_fallthru
        _
      %p1386 = scmp.le.s32.totalorder 2, %s24
      // Predicated region
      $region89: #{tpu_custom_call.1} parent=5 // pred_check
        %p1387 = pneg %p1386
      $region90: #{tpu_custom_call.1} parent=5 // pred_check_branch
        %1389 = sbr.rel (%p1387) target = $region92
      $region91: #{tpu_custom_call.1} parent=5 // pred_region
        %s1390 = ssub.s32 %s24, 2
        // Predicated region
        $region93: #{tpu_custom_call.1} parent=91 // pred_check
          %p1391 = pneg %p331
        $region94: #{tpu_custom_call.1} parent=91 // pred_check_branch
          %1393 = sbr.rel (%p1391) target = $region96
        $region95: #{tpu_custom_call.1} parent=91 // pred_region
          %s1394 = sand.u32 %s316, 1
          %s1395 = scalar_lea.sflag [#allocation4], %s1394
          %s1396 = sand.u32 %s316, 1
          %s1397 = smul.addr %s1396, 16
          %s1398 = scalar_lea.vmem [#allocation8], %s1397
          %1399 = dma.done %s1395, 256
        $region96: #{tpu_custom_call.1} parent=91 // pred_fallthru
          _
      $region92: #{tpu_custom_call.1} parent=5 // pred_fallthru
        _
    $region6: #{tpu_custom_call.1} parent=1 // loop_footer
      %s28 = sadd.s32 1, %s24
    $region7: #{tpu_custom_call.1} parent=1 // loop_footer_branch
      %23 = sbr.rel target = $region3
    $region8: #{tpu_custom_call.1} parent=1 // loop_exit
      _
    %1400 = vsyncpa [#allocation3], 1
    %s1401 = scalar_lea.sflag [#allocation3], 1
    %1402 = vsyncpa %s1401, 1
    %1403 = vsyncpa [#allocation6], 1
    %1404 = vsyncpa [#allocation4], 1
    %s1405 = scalar_lea.sflag [#allocation4], 1
    %1406 = vsyncpa %s1405, 1

</llo_original>
